<compile_context>
chip_gen: v7x
topology: tpu7x:2x2x1
jax: 0.10.0
libtpu: 0.0.40
codegen_flags: <defaults>
</compile_context>

<pallas_src>
import jax
import jax.numpy as jnp
from jax import lax
from jax.experimental import pallas as pl
from jax.experimental.pallas import tpu as pltpu

LANE = 128      # lane width (last dim granularity)
SUBLANE = 8     # sublane count (second-to-last dim granularity)


def _round_up(n, m):
    return ((n + m - 1) // m) * m


def _num_tensorcores():
    """TensorCores addressable by the grid's 'parallel' axis: 2 on v7x, else 1."""
    try:
        kind = jax.devices()[0].device_kind.lower()
    except Exception:
        return 1
    return 2 if ("v7" in kind or "7x" in kind) else 1


# -----------------------------------------------------------------------------
# Parameter construction (PyTorch-shaped) + packing into padded kernel layout.
# -----------------------------------------------------------------------------
def init_params(key, input_size, hidden_size, output_size, gru_input_size, x_hidden):
    """Deterministic synthetic parameters with the PyTorch module's shapes."""
    assert hidden_size == gru_input_size, (
        "RecoveryODENetwork.forward reshapes the GRU hidden state into out[:, idx, :],"
        " which requires hidden_size == gru_input_size (GT-GAN: 24 == 24).")
    I, Hh, O, G, Xh = input_size, hidden_size, output_size, gru_input_size, x_hidden
    s = 0.1
    ks = jax.random.split(key, 13)
    raw = dict(
        # x_model
        w1=jax.random.normal(ks[0], (Xh, I), jnp.float32) * s,
        b1=jax.random.normal(ks[1], (Xh,), jnp.float32) * s,
        w2=jax.random.normal(ks[2], (G, Xh), jnp.float32) * s,
        b2=jax.random.normal(ks[3], (G,), jnp.float32) * s,
        # gru_obs (torch.nn.GRU, gate order r,z,n)
        w_ih=jax.random.normal(ks[4], (3 * Hh, G), jnp.float32) * s,
        w_hh=jax.random.normal(ks[5], (3 * Hh, Hh), jnp.float32) * s,
        b_ih=jax.random.normal(ks[6], (3 * Hh,), jnp.float32) * s,
        b_hh=jax.random.normal(ks[7], (3 * Hh,), jnp.float32) * s,
        # FullGRUODECell_Autonomous (bias=False linears)
        w_hr=jax.random.normal(ks[8], (Hh, Hh), jnp.float32) * s,
        w_hz=jax.random.normal(ks[9], (Hh, Hh), jnp.float32) * s,
        w_hn=jax.random.normal(ks[10], (Hh, Hh), jnp.float32) * s,
        # rec_linear
        w_rec=jax.random.normal(ks[11], (O, G), jnp.float32) * s,
        b_rec=jax.random.normal(ks[12], (O,), jnp.float32) * s,
    )
    return raw


def pack_params(raw, input_size, hidden_size, output_size, gru_input_size, x_hidden):
    """One-time transform: transpose for right-multiplication, zero-pad each gate block
    to 128 lanes so in-kernel gate slices are lane-aligned, and cast weight matrices to
    bf16 (MXU-native).  Biases stay f32.  Zero padding keeps padded hidden lanes exactly
    0 through the recurrence (h0 = 0, padded weight rows/cols and biases are 0)."""
    I, Hh, O, G, Xh = input_size, hidden_size, output_size, gru_input_size, x_hidden
    Xp, Hp, Op = (_round_up(d, LANE) for d in (Xh, Hh, O))   # G pads to Hp (G==Hh)

    def emb(a, shape):
        z = jnp.zeros(shape, jnp.float32)
        return z.at[tuple(slice(0, d) for d in a.shape)].set(a.astype(jnp.float32))

    def emb_gates(w_t, rows, rows_pad, h, h_pad, n_gates):
        out = jnp.zeros((rows_pad, n_gates * h_pad), jnp.float32)
        for g in range(n_gates):
            out = out.at[:rows, g * h_pad:g * h_pad + h].set(
                w_t[:, g * h:(g + 1) * h].astype(jnp.float32))
        return out

    b_ih, b_hh = raw["b_ih"], raw["b_hh"]
    # Fold b_hr / b_hz into the precomputed input projection; b_hn must stay
    # separate because the GRU applies r * (W_hn h + b_hn).
    b_fold = jnp.concatenate([b_ih[:Hh] + b_hh[:Hh],
                              b_ih[Hh:2 * Hh] + b_hh[Hh:2 * Hh],
                              b_ih[2 * Hh:]])

    W = jnp.bfloat16   # weight storage dtype; matmuls accumulate in f32
    kp = dict(
        w1_t=emb(raw["w1"].T, (I, Xp)).astype(W),            # K dim stays native (I)
        b1=emb(raw["b1"][None, :], (1, Xp)),
        w2_t=emb(raw["w2"].T, (Xp, Hp)).astype(W),
        b2=emb(raw["b2"][None, :], (1, Hp)),
        wih_t=emb_gates(raw["w_ih"].T, G, Hp, Hh, Hp, 3).astype(W),
        bih_f=emb_gates(b_fold[None, :], 1, 1, Hh, Hp, 3),
        whh_t=emb_gates(raw["w_hh"].T, Hh, Hp, Hh, Hp, 3).astype(W),
        bhn=emb(b_hh[2 * Hh:][None, :], (1, Hp)),
        wode_rz=emb_gates(jnp.concatenate([raw["w_hr"].T, raw["w_hz"].T], axis=1),
                          Hh, Hp, Hh, Hp, 2).astype(W),
        wode_n=emb(raw["w_hn"].T, (Hp, Hp)).astype(W),
        wrec_t=emb(raw["w_rec"].T, (Hp, Op)).astype(W),
        brec=emb(raw["b_rec"][None, :], (1, Op)),
    )
    dims = dict(I=I, H=Hh, O=O, G=G, Xh=Xh, Xp=Xp, Hp=Hp, Op=Op)
    return kp, dims


# -----------------------------------------------------------------------------
# ODE step-count schedule (mirrors the module's `while current_time < obs - eps`).
# -----------------------------------------------------------------------------
def _ode_step_counts(times, delta_t):
    t_obs = times[0].astype(jnp.float32)                 # module uses times[0]
    t0 = t_obs[0] - 1.0                                   # current_time = times[0,0] - 1
    s = jnp.ceil((t_obs - 0.001 * delta_t - t0) / delta_t)
    s = jnp.maximum(s, 0.0).astype(jnp.int32)             # cumulative Euler steps
    prev = jnp.concatenate([jnp.zeros((1,), jnp.int32), s[:-1]])
    return jnp.maximum(s - prev, 0)                       # steps before each observation


# -----------------------------------------------------------------------------
# Batch-block sizing: whole batch per block on single-TC chips, 2 blocks on v7x,
# capped by an explicit VMEM budget.
# -----------------------------------------------------------------------------
def _pick_batch_block(B, T, dims):
    Hp, Op, I = dims["Hp"], dims["Op"], dims["I"]
    # Resident VMEM bytes per (T*bblk) row: gi + seq f32 scratch + double-buffered x/out.
    per_row = (3 * Hp + Hp) * 4 + 2 * I * 4 + 2 * Op * 4
    weights = 2 * 1024 * 1024                  # double-buffered bf16 weights + biases
    budget = 40 * 1024 * 1024                  # headroom under v7x's 64 MiB physical VMEM
    max_rows = max((budget - weights) // per_row, SUBLANE)
    max_bblk = max((max_rows // max(T, 1)) // SUBLANE * SUBLANE, SUBLANE)

    Bp8 = _round_up(max(B, 1), SUBLANE)
    n_tc = _num_tensorcores()
    if n_tc > 1 and Bp8 >= 2 * SUBLANE:
        bblk = _round_up(-(-Bp8 // n_tc), SUBLANE)        # one block per TensorCore
    else:
        bblk = Bp8                                        # single block = whole batch
    bblk = max(min(bblk, max_bblk), SUBLANE)
    Bp = _round_up(max(B, 1), bblk)
    vmem_est = weights + T * bblk * per_row               # per-block estimate
    return bblk, Bp, vmem_est


# -----------------------------------------------------------------------------
# Fused kernel: x_model + hoisted input projection + time recurrence + rec_linear.
# -----------------------------------------------------------------------------
def _build_kernel(T, BBLK, Hp, delta_t, last_activation):
    f32, bf16 = jnp.float32, jnp.bfloat16

    def kernel(nsteps_ref,                                # SMEM (T,) int32 (prefetch)
               x_ref,                                     # (T, BBLK, I) f32
               w1_ref, b1_ref, w2_ref, b2_ref,            # x_model
               wih_ref, bih_ref, whh_ref, bhn_ref,        # gru_obs
               wrz_ref, wn_ref,                           # GRU-ODE cell
               wrec_ref, brec_ref,                        # rec_linear
               o_ref,                                     # (T, BBLK, Op) f32
               gi_ref, seq_ref):                          # VMEM scratch
        TB = T * BBLK
        dt = float(delta_t)

        # ---- One-shot big MXU matmuls over all timesteps (tile-aligned reshape).
        x = x_ref[...].reshape(TB, x_ref.shape[-1]).astype(bf16)
        h1 = jnp.dot(x, w1_ref[...], preferred_element_type=f32) + b1_ref[...]
        h1 = jnp.maximum(h1, 0.0).astype(bf16)            # ReLU (Dropout p=0 == identity)
        hh = jnp.dot(h1, w2_ref[...], preferred_element_type=f32) + b2_ref[...]
        # Hoisted GRU input projection with folded r/z biases, kept resident in VMEM.
        gi_ref[...] = (jnp.dot(hh.astype(bf16), wih_ref[...],
                               preferred_element_type=f32) + bih_ref[...])

        # ---- Autonomous GRU-ODE Euler step (FullGRUODECell_Autonomous, no biases).
        # Single wide dot for [r|z]; h / Euler update stay f32, only MXU operands bf16.
        def ode_body(h):
            g = jnp.dot(h.astype(bf16), wrz_ref[...], preferred_element_type=f32)
            r = jax.nn.sigmoid(g[:, :Hp])
            z = jax.nn.sigmoid(g[:, Hp:2 * Hp])
            u = jnp.tanh(jnp.dot((r * h).astype(bf16), wn_ref[...],
                                 preferred_element_type=f32))
            return h + dt * (1.0 - z) * (u - h)

        # ---- Sequential recurrence over observation times.
        def time_step(t, h):
            n = nsteps_ref[t]
            # Common case (delta_t == observation spacing) is exactly one Euler step:
            # straight-line path, no dynamic-trip-count loop setup per observation.
            h = lax.cond(
                n == 1,
                ode_body,
                lambda h0: lax.fori_loop(0, n, lambda _, hc: ode_body(hc), h0),
                h)
            row = pl.multiple_of(t * BBLK, SUBLANE)
            gi = gi_ref[pl.ds(row, BBLK), :]                          # (BBLK, 3Hp)
            gh = jnp.dot(h.astype(bf16), whh_ref[...], preferred_element_type=f32)
            r = jax.nn.sigmoid(gi[:, :Hp] + gh[:, :Hp])               # lane-aligned gates
            z = jax.nn.sigmoid(gi[:, Hp:2 * Hp] + gh[:, Hp:2 * Hp])
            nc = jnp.tanh(gi[:, 2 * Hp:] + r * (gh[:, 2 * Hp:] + bhn_ref[...]))
            h_new = (1.0 - z) * nc + z * h
            seq_ref[pl.ds(row, BBLK), :] = h_new                      # out[:, t, :] = h
            return h_new

        h0 = jnp.zeros((BBLK, Hp), f32)
        lax.fori_loop(0, T, time_step, h0)

        # ---- rec_linear over the whole resident sequence (lane-dense output store).
        y = (jnp.dot(seq_ref[...].astype(bf16), wrec_ref[...],
                     preferred_element_type=f32) + brec_ref[...])
        if last_activation == "sigmoid":
            y = jax.nn.sigmoid(y)
        elif last_activation == "tanh":
            y = jnp.tanh(y)
        elif last_activation == "softplus":
            y = jax.nn.softplus(y)
        o_ref[...] = y.reshape(T, BBLK, -1)

    return kernel


def make_forward(kp, dims, *, delta_t, last_activation="identity"):
    Xp, Hp, Op = dims["Xp"], dims["Hp"], dims["Op"]
    I, O = dims["I"], dims["O"]

    @jax.jit
    def forward(H, times):
        B, T, I_in = H.shape
        assert I_in == I
        bblk, Bp, vmem_est = _pick_batch_block(B, T, dims)
        n_bblk = Bp // bblk

        # Wrapper layout plumbing: time-major + batch padded to the block size.  The
        # feature dim stays at its native width I (no 128-lane pad), so this is one
        # cheap fused transpose/pad pass; the output transpose operates on the sliced
        # (T, B, O) array only.
        x = jnp.transpose(H.astype(jnp.float32), (1, 0, 2))          # (T, B, I)
        x = jnp.pad(x, ((0, 0), (0, Bp - B), (0, 0)))                # (T, Bp, I)
        n_steps = _ode_step_counts(times, delta_t)                   # (T,) int32

        kernel = _build_kernel(T, bblk, Hp, delta_t, last_activation)
        grid_spec = pltpu.PrefetchScalarGridSpec(
            num_scalar_prefetch=1,
            grid=(n_bblk,),                                          # batch blocks
            in_specs=[
                pl.BlockSpec((T, bblk, I), lambda b, ns: (0, b, 0)),   # x (native width)
                pl.BlockSpec((I, Xp), lambda b, ns: (0, 0)),           # W1^T (bf16)
                pl.BlockSpec((1, Xp), lambda b, ns: (0, 0)),           # b1
                pl.BlockSpec((Xp, Hp), lambda b, ns: (0, 0)),          # W2^T (bf16)
                pl.BlockSpec((1, Hp), lambda b, ns: (0, 0)),           # b2
                pl.BlockSpec((Hp, 3 * Hp), lambda b, ns: (0, 0)),      # W_ih^T (bf16)
                pl.BlockSpec((1, 3 * Hp), lambda b, ns: (0, 0)),       # folded biases
                pl.BlockSpec((Hp, 3 * Hp), lambda b, ns: (0, 0)),      # W_hh^T (bf16)
                pl.BlockSpec((1, Hp), lambda b, ns: (0, 0)),           # b_hn
                pl.BlockSpec((Hp, 2 * Hp), lambda b, ns: (0, 0)),      # ODE [W_hr|W_hz]^T
                pl.BlockSpec((Hp, Hp), lambda b, ns: (0, 0)),          # ODE W_hh^T
                pl.BlockSpec((Hp, Op), lambda b, ns: (0, 0)),          # W_rec^T (bf16)
                pl.BlockSpec((1, Op), lambda b, ns: (0, 0)),           # b_rec
            ],
            out_specs=pl.BlockSpec((T, bblk, Op), lambda b, ns: (0, b, 0)),
            scratch_shapes=[
                pltpu.VMEM((T * bblk, 3 * Hp), jnp.float32),   # gi for all timesteps
                pltpu.VMEM((T * bblk, Hp), jnp.float32),       # hidden sequence ("out")
            ],
        )
        y = pl.pallas_call(
            kernel,
            out_shape=jax.ShapeDtypeStruct((T, Bp, Op), jnp.float32),
            grid_spec=grid_spec,
            compiler_params=pltpu.CompilerParams(
                dimension_semantics=("parallel",),     # batch blocks -> v7x's 2 TCs
                vmem_limit_bytes=int(min(64 * 1024 * 1024,
                                         max(32 * 1024 * 1024, vmem_est * 3 // 2))),
            ),
        )(n_steps, x, kp["w1_t"], kp["b1"], kp["w2_t"], kp["b2"],
          kp["wih_t"], kp["bih_f"], kp["whh_t"], kp["bhn"],
          kp["wode_rz"], kp["wode_n"], kp["wrec_t"], kp["brec"])

        y = y[:, :B, :O]                                   # strip batch/lane padding
        return jnp.transpose(y, (1, 0, 2))                 # (B, T, output_size)

    return forward


# -----------------------------------------------------------------------------
# Pure-JAX reference (mirrors the PyTorch forward) for validation.
# -----------------------------------------------------------------------------
def reference_forward(H, times, raw, *, delta_t, last_activation="identity"):
    H = H.astype(jnp.float32)
    B, T, _ = H.shape
    Hh = raw["w_hh"].shape[1]
    hh = jax.nn.relu(H @ raw["w1"].T + raw["b1"]) @ raw["w2"].T + raw["b2"]
    n_steps = _ode_step_counts(times, delta_t)
    h = jnp.zeros((B, Hh), jnp.float32)
    outs = []
    for idx in range(T):
        for _ in range(int(n_steps[idx])):
            r = jax.nn.sigmoid(h @ raw["w_hr"].T)
            z = jax.nn.sigmoid(h @ raw["w_hz"].T)
            u = jnp.tanh((r * h) @ raw["w_hn"].T)
            h = h + delta_t * (1.0 - z) * (u - h)
        gi = hh[:, idx, :] @ raw["w_ih"].T + raw["b_ih"]
        gh = h @ raw["w_hh"].T + raw["b_hh"]
        i_r, i_z, i_n = jnp.split(gi, 3, axis=-1)
        h_r, h_z, h_n = jnp.split(gh, 3, axis=-1)
        r = jax.nn.sigmoid(i_r + h_r)
        z = jax.nn.sigmoid(i_z + h_z)
        n = jnp.tanh(i_n + r * h_n)
        h = (1.0 - z) * n + z * h
        outs.append(h)
    out = jnp.stack(outs, axis=1)
    y = out @ raw["w_rec"].T + raw["b_rec"]
    if last_activation == "sigmoid":
        y = jax.nn.sigmoid(y)
    elif last_activation == "tanh":
        y = jnp.tanh(y)
    elif last_activation == "softplus":
        y = jax.nn.softplus(y)
    return y


# -----------------------------------------------------------------------------
if __name__ == "__main__":
    # GT-GAN stocks config ("24 24 6 24 48"), small batch / sequence.
    B, T = 2, 8
    input_size, hidden_size, output_size = 24, 24, 6
    gru_input_size, x_hidden = 24, 48
    delta_t = 1.0
    last_activation = "sigmoid"

    key = jax.random.PRNGKey(0)
    key, pkey, xkey = jax.random.split(key, 3)
    raw = init_params(pkey, input_size, hidden_size, output_size,
                      gru_input_size, x_hidden)
    kp, dims = pack_params(raw, input_size, hidden_size, output_size,
                           gru_input_size, x_hidden)

    H = jax.random.normal(xkey, (B, T, input_size), jnp.float32)
    # Irregular observation times so both the single-step and the multi-step ODE
    # integration paths are exercised.
    t_row = jnp.array([0.0, 1.0, 2.0, 4.0, 5.0, 7.0, 8.0, 9.0], jnp.float32)
    times = jnp.broadcast_to(t_row, (B, T))

    forward = make_forward(kp, dims, delta_t=delta_t, last_activation=last_activation)
    out = forward(H, times)
    jax.block_until_ready(out)

    assert out.shape == (B, T, output_size), out.shape
    assert bool(jnp.all(jnp.isfinite(out)))
    assert bool(jnp.all((out >= 0.0) & (out <= 1.0)))   # sigmoid range

    ref = reference_forward(H, times, raw, delta_t=delta_t,
                            last_activation=last_activation)
    max_err = float(jnp.max(jnp.abs(out - ref)))
    assert max_err < 5e-2, f"max |pallas - reference| = {max_err}"

    print("KERNEL_OK")
</pallas_src>

<mosaic_0001>
module attributes {stable_mosaic.version = 11 : i64} {
  func.func @kernel(%arg0: i32, %arg1: memref<8xi32, #tpu.memory_space<smem>>, %arg2: memref<8x8x24xf32, #tpu.memory_space<vmem>>, %arg3: memref<24x128xbf16, #tpu.memory_space<vmem>>, %arg4: memref<1x128xf32, #tpu.memory_space<vmem>>, %arg5: memref<128x128xbf16, #tpu.memory_space<vmem>>, %arg6: memref<1x128xf32, #tpu.memory_space<vmem>>, %arg7: memref<128x384xbf16, #tpu.memory_space<vmem>>, %arg8: memref<1x384xf32, #tpu.memory_space<vmem>>, %arg9: memref<128x384xbf16, #tpu.memory_space<vmem>>, %arg10: memref<1x128xf32, #tpu.memory_space<vmem>>, %arg11: memref<128x256xbf16, #tpu.memory_space<vmem>>, %arg12: memref<128x128xbf16, #tpu.memory_space<vmem>>, %arg13: memref<128x128xbf16, #tpu.memory_space<vmem>>, %arg14: memref<1x128xf32, #tpu.memory_space<vmem>>, %arg15: memref<8x8x128xf32, #tpu.memory_space<vmem>>, %arg16: memref<64x384xf32, #tpu.memory_space<vmem>>, %arg17: memref<64x128xf32, #tpu.memory_space<vmem>>) attributes {dimension_semantics = [#tpu.dimension_semantics<parallel>], iteration_bounds = array<i64: 1>, scalar_prefetch = 1 : i64, scratch_operands = 2 : i64, tpu.core_type = #tpu.core_type<tc>, window_params = [{transform_indices = @transform_0, window_bounds = array<i64: 8, 8, 24>}, {pipeline_mode = #tpu.pipeline_mode<synchronous>, transform_indices = @transform_1, window_bounds = array<i64: 24, 128>}, {pipeline_mode = #tpu.pipeline_mode<synchronous>, transform_indices = @transform_2, window_bounds = array<i64: 1, 128>}, {pipeline_mode = #tpu.pipeline_mode<synchronous>, transform_indices = @transform_3, window_bounds = array<i64: 128, 128>}, {pipeline_mode = #tpu.pipeline_mode<synchronous>, transform_indices = @transform_4, window_bounds = array<i64: 1, 128>}, {pipeline_mode = #tpu.pipeline_mode<synchronous>, transform_indices = @transform_5, window_bounds = array<i64: 128, 384>}, {pipeline_mode = #tpu.pipeline_mode<synchronous>, transform_indices = @transform_6, window_bounds = array<i64: 1, 384>}, {pipeline_mode = #tpu.pipeline_mode<synchronous>, transform_indices = @transform_7, window_bounds = array<i64: 128, 384>}, {pipeline_mode = #tpu.pipeline_mode<synchronous>, transform_indices = @transform_8, window_bounds = array<i64: 1, 128>}, {pipeline_mode = #tpu.pipeline_mode<synchronous>, transform_indices = @transform_9, window_bounds = array<i64: 128, 256>}, {pipeline_mode = #tpu.pipeline_mode<synchronous>, transform_indices = @transform_10, window_bounds = array<i64: 128, 128>}, {pipeline_mode = #tpu.pipeline_mode<synchronous>, transform_indices = @transform_11, window_bounds = array<i64: 128, 128>}, {pipeline_mode = #tpu.pipeline_mode<synchronous>, transform_indices = @transform_12, window_bounds = array<i64: 1, 128>}, {transform_indices = @transform_13, window_bounds = array<i64: 8, 8, 128>}]} {
    %c0 = arith.constant 0 : index
    %c0_0 = arith.constant 0 : index
    %c0_1 = arith.constant 0 : index
    %0 = vector.load %arg2[%c0, %c0_0, %c0_1] : memref<8x8x24xf32, #tpu.memory_space<vmem>>, vector<8x8x24xf32>
    %1 = vector.shape_cast %0 : vector<8x8x24xf32> to vector<64x24xf32>
    %2 = arith.truncf %1 : vector<64x24xf32> to vector<64x24xbf16>
    %c0_2 = arith.constant 0 : index
    %c0_3 = arith.constant 0 : index
    %3 = vector.load %arg3[%c0_2, %c0_3] : memref<24x128xbf16, #tpu.memory_space<vmem>>, vector<24x128xbf16>
    %cst = arith.constant dense<0.000000e+00> : vector<64x128xf32>
    %4 = tpu.matmul %2, %3, %cst {dimension_numbers = #tpu.dot_dimension_numbers<[1], [0], [0], [1], [0, 0, 1, 1], [], []>} : vector<64x24xbf16>, vector<24x128xbf16>, vector<64x128xf32> -> vector<64x128xf32>
    %c0_4 = arith.constant 0 : index
    %c0_5 = arith.constant 0 : index
    %5 = vector.load %arg4[%c0_4, %c0_5] : memref<1x128xf32, #tpu.memory_space<vmem>>, vector<1x128xf32>
    %6 = vector.broadcast %5 : vector<1x128xf32> to vector<64x128xf32>
    %7 = arith.addf %4, %6 : vector<64x128xf32>
    %cst_6 = arith.constant 0.000000e+00 : f32
    %8 = vector.broadcast %cst_6 : f32 to vector<64x128xf32>
    %9 = arith.maximumf %7, %8 : vector<64x128xf32>
    %10 = arith.truncf %9 : vector<64x128xf32> to vector<64x128xbf16>
    %c0_7 = arith.constant 0 : index
    %c0_8 = arith.constant 0 : index
    %11 = vector.load %arg5[%c0_7, %c0_8] : memref<128x128xbf16, #tpu.memory_space<vmem>>, vector<128x128xbf16>
    %cst_9 = arith.constant dense<0.000000e+00> : vector<64x128xf32>
    %12 = tpu.matmul %10, %11, %cst_9 {dimension_numbers = #tpu.dot_dimension_numbers<[1], [0], [0], [1], [0, 0, 1, 1], [], []>} : vector<64x128xbf16>, vector<128x128xbf16>, vector<64x128xf32> -> vector<64x128xf32>
    %c0_10 = arith.constant 0 : index
    %c0_11 = arith.constant 0 : index
    %13 = vector.load %arg6[%c0_10, %c0_11] : memref<1x128xf32, #tpu.memory_space<vmem>>, vector<1x128xf32>
    %14 = vector.broadcast %13 : vector<1x128xf32> to vector<64x128xf32>
    %15 = arith.addf %12, %14 : vector<64x128xf32>
    %16 = arith.truncf %15 : vector<64x128xf32> to vector<64x128xbf16>
    %c0_12 = arith.constant 0 : index
    %c0_13 = arith.constant 0 : index
    %17 = vector.load %arg7[%c0_12, %c0_13] : memref<128x384xbf16, #tpu.memory_space<vmem>>, vector<128x384xbf16>
    %cst_14 = arith.constant dense<0.000000e+00> : vector<64x384xf32>
    %18 = tpu.matmul %16, %17, %cst_14 {dimension_numbers = #tpu.dot_dimension_numbers<[1], [0], [0], [1], [0, 0, 1, 1], [], []>} : vector<64x128xbf16>, vector<128x384xbf16>, vector<64x384xf32> -> vector<64x384xf32>
    %c0_15 = arith.constant 0 : index
    %c0_16 = arith.constant 0 : index
    %19 = vector.load %arg8[%c0_15, %c0_16] : memref<1x384xf32, #tpu.memory_space<vmem>>, vector<1x384xf32>
    %20 = vector.broadcast %19 : vector<1x384xf32> to vector<64x384xf32>
    %21 = arith.addf %18, %20 : vector<64x384xf32>
    %c0_17 = arith.constant 0 : index
    %c0_18 = arith.constant 0 : index
    %22 = vector.load %arg16[%c0_17, %c0_18] : memref<64x384xf32, #tpu.memory_space<vmem>>, vector<64x384xf32>
    tpu.vector_store %arg16[%c0_17, %c0_18], %21 {strides = array<i32>} : memref<64x384xf32, #tpu.memory_space<vmem>>, vector<64x384xf32>,
    %cst_19 = arith.constant 0.000000e+00 : f32
    %23 = vector.broadcast %cst_19 : f32 to vector<8x128xf32>
    %c0_i32 = arith.constant 0 : i32
    %c8_i32 = arith.constant 8 : i32
    %24 = arith.addi %c0_i32, %c8_i32 : i32
    %c1_i32 = arith.constant 1 : i32
    %25 = scf.for %arg18 = %c0_i32 to %24 step %c1_i32 iter_args(%arg19 = %23) -> (vector<8x128xf32>)  : i32 {
      %40 = arith.index_cast %arg18 : i32 to index
      %41 = memref.load %arg1[%40] : memref<8xi32, #tpu.memory_space<smem>>
      %c1_i32_32 = arith.constant 1 : i32
      %42 = arith.cmpi eq, %41, %c1_i32_32 : i32
      %43 = arith.extui %42 : i1 to i32
      %c0_i32_33 = arith.constant 0 : i32
      %44 = arith.cmpi ne, %43, %c0_i32_33 : i32
      %45 = scf.if %44 -> (vector<8x128xf32>) {
        %84 = arith.truncf %arg19 : vector<8x128xf32> to vector<8x128xbf16>
        %c0_45 = arith.constant 0 : index
        %c0_46 = arith.constant 0 : index
        %85 = vector.load %arg11[%c0_45, %c0_46] : memref<128x256xbf16, #tpu.memory_space<vmem>>, vector<128x256xbf16>
        %cst_47 = arith.constant dense<0.000000e+00> : vector<8x256xf32>
        %86 = tpu.matmul %84, %85, %cst_47 {dimension_numbers = #tpu.dot_dimension_numbers<[1], [0], [0], [1], [0, 0, 1, 1], [], []>} : vector<8x128xbf16>, vector<128x256xbf16>, vector<8x256xf32> -> vector<8x256xf32>
        %87 = vector.extract_strided_slice %86 {offsets = [0, 0], sizes = [8, 128], strides = [1, 1]} : vector<8x256xf32> to vector<8x128xf32>
        %88 = arith.negf %87 : vector<8x128xf32>
        %89 = math.exp %88 : vector<8x128xf32>
        %cst_48 = arith.constant 1.000000e+00 : f32
        %90 = vector.broadcast %cst_48 : f32 to vector<8x128xf32>
        %91 = arith.addf %90, %89 : vector<8x128xf32>
        %92 = arith.divf %90, %91 : vector<8x128xf32>
        %93 = vector.extract_strided_slice %86 {offsets = [0, 128], sizes = [8, 128], strides = [1, 1]} : vector<8x256xf32> to vector<8x128xf32>
        %94 = arith.negf %93 : vector<8x128xf32>
        %95 = math.exp %94 : vector<8x128xf32>
        %cst_49 = arith.constant 1.000000e+00 : f32
        %96 = vector.broadcast %cst_49 : f32 to vector<8x128xf32>
        %97 = arith.addf %96, %95 : vector<8x128xf32>
        %98 = arith.divf %96, %97 : vector<8x128xf32>
        %99 = arith.mulf %92, %arg19 : vector<8x128xf32>
        %100 = arith.truncf %99 : vector<8x128xf32> to vector<8x128xbf16>
        %c0_50 = arith.constant 0 : index
        %c0_51 = arith.constant 0 : index
        %101 = vector.load %arg12[%c0_50, %c0_51] : memref<128x128xbf16, #tpu.memory_space<vmem>>, vector<128x128xbf16>
        %cst_52 = arith.constant dense<0.000000e+00> : vector<8x128xf32>
        %102 = tpu.matmul %100, %101, %cst_52 {dimension_numbers = #tpu.dot_dimension_numbers<[1], [0], [0], [1], [0, 0, 1, 1], [], []>} : vector<8x128xbf16>, vector<128x128xbf16>, vector<8x128xf32> -> vector<8x128xf32>
        %103 = math.tanh %102 : vector<8x128xf32>
        %cst_53 = arith.constant 1.000000e+00 : f32
        %104 = vector.broadcast %cst_53 : f32 to vector<8x128xf32>
        %105 = arith.subf %104, %98 : vector<8x128xf32>
        %cst_54 = arith.constant 1.000000e+00 : f32
        %106 = vector.broadcast %cst_54 : f32 to vector<8x128xf32>
        %107 = arith.mulf %106, %105 : vector<8x128xf32>
        %108 = arith.subf %103, %arg19 : vector<8x128xf32>
        %109 = arith.mulf %107, %108 : vector<8x128xf32>
        %110 = arith.addf %arg19, %109 : vector<8x128xf32>
        scf.yield %110 : vector<8x128xf32>
      } else {
        %c0_i32_45 = arith.constant 0 : i32
        %84 = arith.subi %41, %c0_i32_45 : i32
        %85 = arith.addi %c0_i32_45, %84 : i32
        %c1_i32_46 = arith.constant 1 : i32
        %86 = scf.for %arg20 = %c0_i32_45 to %85 step %c1_i32_46 iter_args(%arg21 = %arg19) -> (vector<8x128xf32>)  : i32 {
          %87 = arith.truncf %arg21 : vector<8x128xf32> to vector<8x128xbf16>
          %c0_47 = arith.constant 0 : index
          %c0_48 = arith.constant 0 : index
          %88 = vector.load %arg11[%c0_47, %c0_48] : memref<128x256xbf16, #tpu.memory_space<vmem>>, vector<128x256xbf16>
          %cst_49 = arith.constant dense<0.000000e+00> : vector<8x256xf32>
          %89 = tpu.matmul %87, %88, %cst_49 {dimension_numbers = #tpu.dot_dimension_numbers<[1], [0], [0], [1], [0, 0, 1, 1], [], []>} : vector<8x128xbf16>, vector<128x256xbf16>, vector<8x256xf32> -> vector<8x256xf32>
          %90 = vector.extract_strided_slice %89 {offsets = [0, 0], sizes = [8, 128], strides = [1, 1]} : vector<8x256xf32> to vector<8x128xf32>
          %91 = arith.negf %90 : vector<8x128xf32>
          %92 = math.exp %91 : vector<8x128xf32>
          %cst_50 = arith.constant 1.000000e+00 : f32
          %93 = vector.broadcast %cst_50 : f32 to vector<8x128xf32>
          %94 = arith.addf %93, %92 : vector<8x128xf32>
          %95 = arith.divf %93, %94 : vector<8x128xf32>
          %96 = vector.extract_strided_slice %89 {offsets = [0, 128], sizes = [8, 128], strides = [1, 1]} : vector<8x256xf32> to vector<8x128xf32>
          %97 = arith.negf %96 : vector<8x128xf32>
          %98 = math.exp %97 : vector<8x128xf32>
          %cst_51 = arith.constant 1.000000e+00 : f32
          %99 = vector.broadcast %cst_51 : f32 to vector<8x128xf32>
          %100 = arith.addf %99, %98 : vector<8x128xf32>
          %101 = arith.divf %99, %100 : vector<8x128xf32>
          %102 = arith.mulf %95, %arg21 : vector<8x128xf32>
          %103 = arith.truncf %102 : vector<8x128xf32> to vector<8x128xbf16>
          %c0_52 = arith.constant 0 : index
          %c0_53 = arith.constant 0 : index
          %104 = vector.load %arg12[%c0_52, %c0_53] : memref<128x128xbf16, #tpu.memory_space<vmem>>, vector<128x128xbf16>
          %cst_54 = arith.constant dense<0.000000e+00> : vector<8x128xf32>
          %105 = tpu.matmul %103, %104, %cst_54 {dimension_numbers = #tpu.dot_dimension_numbers<[1], [0], [0], [1], [0, 0, 1, 1], [], []>} : vector<8x128xbf16>, vector<128x128xbf16>, vector<8x128xf32> -> vector<8x128xf32>
          %106 = math.tanh %105 : vector<8x128xf32>
          %cst_55 = arith.constant 1.000000e+00 : f32
          %107 = vector.broadcast %cst_55 : f32 to vector<8x128xf32>
          %108 = arith.subf %107, %101 : vector<8x128xf32>
          %cst_56 = arith.constant 1.000000e+00 : f32
          %109 = vector.broadcast %cst_56 : f32 to vector<8x128xf32>
          %110 = arith.mulf %109, %108 : vector<8x128xf32>
          %111 = arith.subf %106, %arg21 : vector<8x128xf32>
          %112 = arith.mulf %110, %111 : vector<8x128xf32>
          %113 = arith.addf %arg21, %112 : vector<8x128xf32>
          scf.yield %113 : vector<8x128xf32>
        }
        scf.yield %86 : vector<8x128xf32>
      }
      %c8_i32_34 = arith.constant 8 : i32
      %46 = arith.muli %arg18, %c8_i32_34 : i32
      %47 = tpu.assume_multiple %46, 8 : i32
      %48 = arith.index_cast %47 : i32 to index
      %c0_35 = arith.constant 0 : index
      %49 = vector.load %arg16[%48, %c0_35] : memref<64x384xf32, #tpu.memory_space<vmem>>, vector<8x384xf32>
      %50 = arith.truncf %45 : vector<8x128xf32> to vector<8x128xbf16>
      %c0_36 = arith.constant 0 : index
      %c0_37 = arith.constant 0 : index
      %51 = vector.load %arg9[%c0_36, %c0_37] : memref<128x384xbf16, #tpu.memory_space<vmem>>, vector<128x384xbf16>
      %cst_38 = arith.constant dense<0.000000e+00> : vector<8x384xf32>
      %52 = tpu.matmul %50, %51, %cst_38 {dimension_numbers = #tpu.dot_dimension_numbers<[1], [0], [0], [1], [0, 0, 1, 1], [], []>} : vector<8x128xbf16>, vector<128x384xbf16>, vector<8x384xf32> -> vector<8x384xf32>
      %53 = vector.extract_strided_slice %49 {offsets = [0, 0], sizes = [8, 128], strides = [1, 1]} : vector<8x384xf32> to vector<8x128xf32>
      %54 = vector.extract_strided_slice %52 {offsets = [0, 0], sizes = [8, 128], strides = [1, 1]} : vector<8x384xf32> to vector<8x128xf32>
      %55 = arith.addf %53, %54 : vector<8x128xf32>
      %56 = arith.negf %55 : vector<8x128xf32>
      %57 = math.exp %56 : vector<8x128xf32>
      %cst_39 = arith.constant 1.000000e+00 : f32
      %58 = vector.broadcast %cst_39 : f32 to vector<8x128xf32>
      %59 = arith.addf %58, %57 : vector<8x128xf32>
      %60 = arith.divf %58, %59 : vector<8x128xf32>
      %61 = vector.extract_strided_slice %49 {offsets = [0, 128], sizes = [8, 128], strides = [1, 1]} : vector<8x384xf32> to vector<8x128xf32>
      %62 = vector.extract_strided_slice %52 {offsets = [0, 128], sizes = [8, 128], strides = [1, 1]} : vector<8x384xf32> to vector<8x128xf32>
      %63 = arith.addf %61, %62 : vector<8x128xf32>
      %64 = arith.negf %63 : vector<8x128xf32>
      %65 = math.exp %64 : vector<8x128xf32>
      %cst_40 = arith.constant 1.000000e+00 : f32
      %66 = vector.broadcast %cst_40 : f32 to vector<8x128xf32>
      %67 = arith.addf %66, %65 : vector<8x128xf32>
      %68 = arith.divf %66, %67 : vector<8x128xf32>
      %69 = vector.extract_strided_slice %49 {offsets = [0, 256], sizes = [8, 128], strides = [1, 1]} : vector<8x384xf32> to vector<8x128xf32>
      %70 = vector.extract_strided_slice %52 {offsets = [0, 256], sizes = [8, 128], strides = [1, 1]} : vector<8x384xf32> to vector<8x128xf32>
      %c0_41 = arith.constant 0 : index
      %c0_42 = arith.constant 0 : index
      %71 = vector.load %arg10[%c0_41, %c0_42] : memref<1x128xf32, #tpu.memory_space<vmem>>, vector<1x128xf32>
      %72 = vector.broadcast %71 : vector<1x128xf32> to vector<8x128xf32>
      %73 = arith.addf %70, %72 : vector<8x128xf32>
      %74 = arith.mulf %60, %73 : vector<8x128xf32>
      %75 = arith.addf %69, %74 : vector<8x128xf32>
      %76 = math.tanh %75 : vector<8x128xf32>
      %cst_43 = arith.constant 1.000000e+00 : f32
      %77 = vector.broadcast %cst_43 : f32 to vector<8x128xf32>
      %78 = arith.subf %77, %68 : vector<8x128xf32>
      %79 = arith.mulf %78, %76 : vector<8x128xf32>
      %80 = arith.mulf %68, %45 : vector<8x128xf32>
      %81 = arith.addf %79, %80 : vector<8x128xf32>
      %82 = arith.index_cast %47 : i32 to index
      %c0_44 = arith.constant 0 : index
      %83 = vector.load %arg17[%82, %c0_44] : memref<64x128xf32, #tpu.memory_space<vmem>>, vector<8x128xf32>
      tpu.vector_store %arg17[%82, %c0_44], %81 {strides = array<i32>} : memref<64x128xf32, #tpu.memory_space<vmem>>, vector<8x128xf32>,
      scf.yield %81 : vector<8x128xf32>
    }
    %c8_i32_20 = arith.constant 8 : i32
    %c0_21 = arith.constant 0 : index
    %c0_22 = arith.constant 0 : index
    %26 = vector.load %arg17[%c0_21, %c0_22] : memref<64x128xf32, #tpu.memory_space<vmem>>, vector<64x128xf32>
    %27 = arith.truncf %26 : vector<64x128xf32> to vector<64x128xbf16>
    %c0_23 = arith.constant 0 : index
    %c0_24 = arith.constant 0 : index
    %28 = vector.load %arg13[%c0_23, %c0_24] : memref<128x128xbf16, #tpu.memory_space<vmem>>, vector<128x128xbf16>
    %cst_25 = arith.constant dense<0.000000e+00> : vector<64x128xf32>
    %29 = tpu.matmul %27, %28, %cst_25 {dimension_numbers = #tpu.dot_dimension_numbers<[1], [0], [0], [1], [0, 0, 1, 1], [], []>} : vector<64x128xbf16>, vector<128x128xbf16>, vector<64x128xf32> -> vector<64x128xf32>
    %c0_26 = arith.constant 0 : index
    %c0_27 = arith.constant 0 : index
    %30 = vector.load %arg14[%c0_26, %c0_27] : memref<1x128xf32, #tpu.memory_space<vmem>>, vector<1x128xf32>
    %31 = vector.broadcast %30 : vector<1x128xf32> to vector<64x128xf32>
    %32 = arith.addf %29, %31 : vector<64x128xf32>
    %33 = arith.negf %32 : vector<64x128xf32>
    %34 = math.exp %33 : vector<64x128xf32>
    %cst_28 = arith.constant 1.000000e+00 : f32
    %35 = vector.broadcast %cst_28 : f32 to vector<64x128xf32>
    %36 = arith.addf %35, %34 : vector<64x128xf32>
    %37 = arith.divf %35, %36 : vector<64x128xf32>
    %38 = vector.shape_cast %37 : vector<64x128xf32> to vector<8x8x128xf32>
    %c0_29 = arith.constant 0 : index
    %c0_30 = arith.constant 0 : index
    %c0_31 = arith.constant 0 : index
    %39 = vector.load %arg15[%c0_29, %c0_30, %c0_31] : memref<8x8x128xf32, #tpu.memory_space<vmem>>, vector<8x8x128xf32>
    tpu.vector_store %arg15[%c0_29, %c0_30, %c0_31], %38 {strides = array<i32>} : memref<8x8x128xf32, #tpu.memory_space<vmem>>, vector<8x8x128xf32>,
    return
  }
  func.func @transform_0(%arg0: i32, %arg1: memref<8xi32, #tpu.memory_space<smem>>) -> (i32, i32, i32) {
    %c0_i32 = arith.constant 0 : i32
    %c0_i32_0 = arith.constant 0 : i32
    %c0_i32_1 = arith.constant 0 : i32
    return %c0_i32, %arg0, %c0_i32_0 : i32, i32, i32
  }
  func.func @transform_1(%arg0: i32, %arg1: memref<8xi32, #tpu.memory_space<smem>>) -> (i32, i32) {
    %c0_i32 = arith.constant 0 : i32
    %c0_i32_0 = arith.constant 0 : i32
    %c0_i32_1 = arith.constant 0 : i32
    return %c0_i32, %c0_i32_0 : i32, i32
  }
  func.func @transform_2(%arg0: i32, %arg1: memref<8xi32, #tpu.memory_space<smem>>) -> (i32, i32) {
    %c0_i32 = arith.constant 0 : i32
    %c0_i32_0 = arith.constant 0 : i32
    %c0_i32_1 = arith.constant 0 : i32
    return %c0_i32, %c0_i32_0 : i32, i32
  }
  func.func @transform_3(%arg0: i32, %arg1: memref<8xi32, #tpu.memory_space<smem>>) -> (i32, i32) {
    %c0_i32 = arith.constant 0 : i32
    %c0_i32_0 = arith.constant 0 : i32
    %c0_i32_1 = arith.constant 0 : i32
    return %c0_i32, %c0_i32_0 : i32, i32
  }
  func.func @transform_4(%arg0: i32, %arg1: memref<8xi32, #tpu.memory_space<smem>>) -> (i32, i32) {
    %c0_i32 = arith.constant 0 : i32
    %c0_i32_0 = arith.constant 0 : i32
    %c0_i32_1 = arith.constant 0 : i32
    return %c0_i32, %c0_i32_0 : i32, i32
  }
  func.func @transform_5(%arg0: i32, %arg1: memref<8xi32, #tpu.memory_space<smem>>) -> (i32, i32) {
    %c0_i32 = arith.constant 0 : i32
    %c0_i32_0 = arith.constant 0 : i32
    %c0_i32_1 = arith.constant 0 : i32
    return %c0_i32, %c0_i32_0 : i32, i32
  }
  func.func @transform_6(%arg0: i32, %arg1: memref<8xi32, #tpu.memory_space<smem>>) -> (i32, i32) {
    %c0_i32 = arith.constant 0 : i32
    %c0_i32_0 = arith.constant 0 : i32
    %c0_i32_1 = arith.constant 0 : i32
    return %c0_i32, %c0_i32_0 : i32, i32
  }
  func.func @transform_7(%arg0: i32, %arg1: memref<8xi32, #tpu.memory_space<smem>>) -> (i32, i32) {
    %c0_i32 = arith.constant 0 : i32
    %c0_i32_0 = arith.constant 0 : i32
    %c0_i32_1 = arith.constant 0 : i32
    return %c0_i32, %c0_i32_0 : i32, i32
  }
  func.func @transform_8(%arg0: i32, %arg1: memref<8xi32, #tpu.memory_space<smem>>) -> (i32, i32) {
    %c0_i32 = arith.constant 0 : i32
    %c0_i32_0 = arith.constant 0 : i32
    %c0_i32_1 = arith.constant 0 : i32
    return %c0_i32, %c0_i32_0 : i32, i32
  }
  func.func @transform_9(%arg0: i32, %arg1: memref<8xi32, #tpu.memory_space<smem>>) -> (i32, i32) {
    %c0_i32 = arith.constant 0 : i32
    %c0_i32_0 = arith.constant 0 : i32
    %c0_i32_1 = arith.constant 0 : i32
    return %c0_i32, %c0_i32_0 : i32, i32
  }
  func.func @transform_10(%arg0: i32, %arg1: memref<8xi32, #tpu.memory_space<smem>>) -> (i32, i32) {
    %c0_i32 = arith.constant 0 : i32
    %c0_i32_0 = arith.constant 0 : i32
    %c0_i32_1 = arith.constant 0 : i32
    return %c0_i32, %c0_i32_0 : i32, i32
  }
  func.func @transform_11(%arg0: i32, %arg1: memref<8xi32, #tpu.memory_space<smem>>) -> (i32, i32) {
    %c0_i32 = arith.constant 0 : i32
    %c0_i32_0 = arith.constant 0 : i32
    %c0_i32_1 = arith.constant 0 : i32
    return %c0_i32, %c0_i32_0 : i32, i32
  }
  func.func @transform_12(%arg0: i32, %arg1: memref<8xi32, #tpu.memory_space<smem>>) -> (i32, i32) {
    %c0_i32 = arith.constant 0 : i32
    %c0_i32_0 = arith.constant 0 : i32
    %c0_i32_1 = arith.constant 0 : i32
    return %c0_i32, %c0_i32_0 : i32, i32
  }
  func.func @transform_13(%arg0: i32, %arg1: memref<8xi32, #tpu.memory_space<smem>>) -> (i32, i32, i32) {
    %c0_i32 = arith.constant 0 : i32
    %c0_i32_0 = arith.constant 0 : i32
    %c0_i32_1 = arith.constant 0 : i32
    return %c0_i32, %arg0, %c0_i32_0 : i32, i32, i32
  }
}

</mosaic_0001>

<llo_original>
// kernel: forward.1
$region0: #{forward.1}
  #allocation0 [shape = 'u32[]', space=smem, size = 0x4, offset = 0x4, fixed_abs, tag = 'smem constant byte address 0x4 - core index']
  #allocation1 [shape = 'u32[144,128]{1,0:T(1,128)}', space=vmem, size = 0x12000, scoped, tag = 'internal scratch']
  #allocation2 [shape = 'f32[64,384]{1,0:T(8,128)}', space=vmem, size = 0x18000, scoped, tag = 'scratch operand']
  #allocation3 [shape = 'f32[64,128]{1,0:T(8,128)}', space=vmem, size = 0x8000, scoped, tag = 'scratch operand']
  #allocation4 [shape = 's32[1]{0}', space=sflag, size = 0x4, scoped, tag = 'scoped memory for forward.1']
  #allocation5 [shape = 'u8[512]{0}', space=smem, size = 0x200, scoped, tag = 'prefetched SMEM operand 0']
  %s0 = inlined_call_operand.vmem [shape: s32[8], index: 0, kind: input, shape index: {}]
  %s1 = inlined_call_operand.vmem [shape: f32[8,8,24], index: 1, kind: input, shape index: {}]
  %s2 = inlined_call_operand.vmem [shape: bf16[24,128], index: 2, kind: input, shape index: {}]
  %s3 = inlined_call_operand.vmem [shape: f32[1,128], index: 3, kind: input, shape index: {}]
  %s4 = inlined_call_operand.vmem [shape: bf16[128,128], index: 4, kind: input, shape index: {}]
  %s5 = inlined_call_operand.vmem [shape: f32[1,128], index: 5, kind: input, shape index: {}]
  %s6 = inlined_call_operand.vmem [shape: bf16[128,384], index: 6, kind: input, shape index: {}]
  %s7 = inlined_call_operand.vmem [shape: f32[1,384], index: 7, kind: input, shape index: {}]
  %s8 = inlined_call_operand.vmem [shape: bf16[128,384], index: 8, kind: input, shape index: {}]
  %s9 = inlined_call_operand.vmem [shape: f32[1,128], index: 9, kind: input, shape index: {}]
  %s10 = inlined_call_operand.vmem [shape: bf16[128,256], index: 10, kind: input, shape index: {}]
  %s11 = inlined_call_operand.vmem [shape: bf16[128,128], index: 11, kind: input, shape index: {}]
  %s12 = inlined_call_operand.vmem [shape: bf16[128,128], index: 12, kind: input, shape index: {}]
  %s13 = inlined_call_operand.vmem [shape: f32[1,128], index: 13, kind: input, shape index: {}]
  %s14 = inlined_call_operand.vmem [shape: f32[8,8,128], index: 14, kind: output, shape index: {}]
  %s15 = sld [smem:[#allocation0]]
  $region84: #{forward.1} parent=0
    _
  %s17 = ssub.s32 1, %s15
  %s18 = scalar_select 0, %s17, %s15
  %s19 = sshll.u32 %s0, 4
  %s20 = int_to_ptr.vmem [resolvable:$true] %s19
  %22 = dma.vmem_to_smem %s20, 16, [#allocation5], [#allocation4]
  %23 = dma.done [#allocation4], 16
  %24 = sfence
  // Predicated region
  $region2: #{forward.1} parent=0 // pred_check
    _
  $region3: #{forward.1} parent=0 // pred_check_branch
    %26 = sbr.rel (0) target = $region5
  $region4: #{forward.1} parent=0 // pred_region
    _
  $region5: #{forward.1} parent=0 // pred_fallthru
    _
  // Predicated region
  $region6: #{forward.1} parent=0 // pred_check
    _
  $region7: #{forward.1} parent=0 // pred_check_branch
    %28 = sbr.rel (0) target = $region9
  $region8: #{forward.1} parent=0 // pred_region
    _
  $region9: #{forward.1} parent=0 // pred_fallthru
    _
  // Predicated region
  $region10: #{forward.1} parent=0 // pred_check
    _
  $region11: #{forward.1} parent=0 // pred_check_branch
    %30 = sbr.rel (0) target = $region13
  $region12: #{forward.1} parent=0 // pred_region
    _
  $region13: #{forward.1} parent=0 // pred_fallthru
    _
  // Predicated region
  $region14: #{forward.1} parent=0 // pred_check
    _
  $region15: #{forward.1} parent=0 // pred_check_branch
    %32 = sbr.rel (0) target = $region17
  $region16: #{forward.1} parent=0 // pred_region
    _
  $region17: #{forward.1} parent=0 // pred_fallthru
    _
  // Predicated region
  $region18: #{forward.1} parent=0 // pred_check
    _
  $region19: #{forward.1} parent=0 // pred_check_branch
    %34 = sbr.rel (0) target = $region21
  $region20: #{forward.1} parent=0 // pred_region
    _
  $region21: #{forward.1} parent=0 // pred_fallthru
    _
  // Predicated region
  $region22: #{forward.1} parent=0 // pred_check
    _
  $region23: #{forward.1} parent=0 // pred_check_branch
    %36 = sbr.rel (0) target = $region25
  $region24: #{forward.1} parent=0 // pred_region
    _
  $region25: #{forward.1} parent=0 // pred_fallthru
    _
  // Predicated region
  $region26: #{forward.1} parent=0 // pred_check
    _
  $region27: #{forward.1} parent=0 // pred_check_branch
    %38 = sbr.rel (0) target = $region29
  $region28: #{forward.1} parent=0 // pred_region
    _
  $region29: #{forward.1} parent=0 // pred_fallthru
    _
  // Predicated region
  $region30: #{forward.1} parent=0 // pred_check
    _
  $region31: #{forward.1} parent=0 // pred_check_branch
    %40 = sbr.rel (0) target = $region33
  $region32: #{forward.1} parent=0 // pred_region
    _
  $region33: #{forward.1} parent=0 // pred_fallthru
    _
  // Predicated region
  $region34: #{forward.1} parent=0 // pred_check
    _
  $region35: #{forward.1} parent=0 // pred_check_branch
    %42 = sbr.rel (0) target = $region37
  $region36: #{forward.1} parent=0 // pred_region
    _
  $region37: #{forward.1} parent=0 // pred_fallthru
    _
  // Predicated region
  $region38: #{forward.1} parent=0 // pred_check
    _
  $region39: #{forward.1} parent=0 // pred_check_branch
    %44 = sbr.rel (0) target = $region41
  $region40: #{forward.1} parent=0 // pred_region
    _
  $region41: #{forward.1} parent=0 // pred_fallthru
    _
  // Predicated region
  $region42: #{forward.1} parent=0 // pred_check
    _
  $region43: #{forward.1} parent=0 // pred_check_branch
    %46 = sbr.rel (0) target = $region45
  $region44: #{forward.1} parent=0 // pred_region
    _
  $region45: #{forward.1} parent=0 // pred_fallthru
    _
  // Predicated region
  $region46: #{forward.1} parent=0 // pred_check
    _
  $region47: #{forward.1} parent=0 // pred_check_branch
    %48 = sbr.rel (0) target = $region49
  $region48: #{forward.1} parent=0 // pred_region
    _
  $region49: #{forward.1} parent=0 // pred_fallthru
    _
  // Predicated region
  $region50: #{forward.1} parent=0 // pred_check
    _
  $region51: #{forward.1} parent=0 // pred_check_branch
    %50 = sbr.rel (0) target = $region53
  $region52: #{forward.1} parent=0 // pred_region
    _
  $region53: #{forward.1} parent=0 // pred_fallthru
    _
  %v52 = vld [vmem:[%s1] sm:$0xff]
  %v53 = vld [vmem:[%s1 + $0x8] sm:$0xff]
  %v54 = vld [vmem:[%s1 + $0x10] sm:$0xff]
  %v55 = vld [vmem:[%s1 + $0x18] sm:$0xff]
  %v56 = vld [vmem:[%s1 + $0x20] sm:$0xff]
  %v57 = vld [vmem:[%s1 + $0x28] sm:$0xff]
  %v58 = vld [vmem:[%s1 + $0x30] sm:$0xff]
  %v59 = vld [vmem:[%s1 + $0x38] sm:$0xff]
  %v60 = vpack.c.bf16 %v53, %v52
  %v61 = vpack.c.bf16 %v55, %v54
  %v62 = vpack.c.bf16 %v57, %v56
  %v63 = vpack.c.bf16 %v59, %v58
  %v64 = vld [vmem:[%s2] sm:$0xf]
  %v65 = vld [vmem:[%s2 + $0x4] sm:$0xf]
  %v66 = vld [vmem:[%s2 + $0x8] sm:$0xf]
  %v67 = vld [vmem:[%s3] sm:$0x1]
  %v69 = vlaneseq
  %v70 = vshrl.u32 %v69, 7
  %v71 = vsub.s32 0, %v70
  %v72 = vrot.slane %v67, %v71
  %v77 = vunpack.c.l.b16 %v64
  %v78 = vunpack.c.l.b16 %v65
  %v79 = vunpack.c.l.b16 %v66
  %v80 = vpack.c.b16 %v78, %v77
  %v81 = vpack.c.b16 %v79, %v79
  %vm83 = vcmask 195584
  %v85 = vsel %vm83, %v60, 0
  %v88 = vsel %vm83, %v61, 0
  %v91 = vsel %vm83, %v62, 0
  %v94 = vsel %vm83, %v63, 0
  %vm96 = vcmask 1043456
  %v98 = vsel %vm96, %v81, 0
  %100 = vmatprep.subr.bf16.mxu0 0
  %101 = vmatpush1.bf16.msra.mxu0 %v80
  %102 = vmatprep.subr.bf16.mxu0 0
  %103 = vmatpush1.bf16.msra.mxu0 %v98
  %104 = vmatprep.subr.bf16.mxu0 0
  %105 = vmatpush1.bf16.msra.mxu0 0
  %106 = vmatprep.subr.bf16.mxu0 0
  %107 = vmatpush1.bf16.msra.mxu0 0
  %108 = vmatprep.subr.bf16.mxu0 0
  %109 = vmatpush1.bf16.msra.mxu0 0
  %110 = vmatprep.subr.bf16.mxu0 0
  %111 = vmatpush1.bf16.msra.mxu0 0
  %112 = vmatprep.subr.bf16.mxu0 0
  %113 = vmatpush1.bf16.msra.mxu0 0
  %114 = vmatprep.subr.bf16.mxu0 0
  %115 = vmatpush1.bf16.msra.mxu0 0
  %116 = vmatprep.subr.bf16.mxu0 0
  %117 = vmatpush1.bf16.msra.mxu0 0
  %118 = vmatprep.subr.bf16.mxu0 0
  %119 = vmatpush1.bf16.msra.mxu0 0
  %120 = vmatprep.subr.bf16.mxu0 0
  %121 = vmatpush1.bf16.msra.mxu0 0
  %122 = vmatprep.subr.bf16.mxu0 0
  %123 = vmatpush1.bf16.msra.mxu0 0
  %124 = vmatprep.subr.bf16.mxu0 0
  %125 = vmatpush1.bf16.msra.mxu0 0
  %126 = vmatprep.subr.bf16.mxu0 0
  %127 = vmatpush1.bf16.msra.mxu0 0
  %128 = vmatprep.subr.bf16.mxu0 0
  %129 = vmatpush1.bf16.msra.mxu0 0
  %130 = vmatprep.subr.bf16.mxu0 0
  %131 = vmatpush1.bf16.msra.mxu0 0
  %132 = vmatprep.mubr.bf16.mxu0 0
  %133 = vmatmul.mubr.bf16.gmra.mrb[0].mxu0 %v85
  %v134 = vpop.f32.mrb[0].mxu0
  %v135 = vadd.f32 %v72, %v134
  %v136 = vpop.f32.mrb[0].mxu0
  %v137 = vpop.f32.mrb[0].mxu0
  %v138 = vadd.f32 %v72, %v137
  %v139 = vpop.f32.mrb[0].mxu0
  %140 = vmatprep.mubr.bf16.mxu0 0
  %141 = vmatmul.mubr.bf16.gmra.mrb[0].mxu0 %v88
  %v142 = vpop.f32.mrb[0].mxu0
  %v143 = vadd.f32 %v72, %v142
  %v144 = vpop.f32.mrb[0].mxu0
  %v145 = vpop.f32.mrb[0].mxu0
  %v146 = vadd.f32 %v72, %v145
  %v147 = vpop.f32.mrb[0].mxu0
  %148 = vmatprep.mubr.bf16.mxu0 0
  %149 = vmatmul.mubr.bf16.gmra.mrb[0].mxu0 %v91
  %v150 = vpop.f32.mrb[0].mxu0
  %v151 = vadd.f32 %v72, %v150
  %v152 = vpop.f32.mrb[0].mxu0
  %v153 = vpop.f32.mrb[0].mxu0
  %v154 = vadd.f32 %v72, %v153
  %v155 = vpop.f32.mrb[0].mxu0
  %156 = vmatprep.mubr.bf16.mxu0 0
  %157 = vmatmul.mubr.bf16.gmra.mrb[0].mxu0 %v94
  %v158 = vpop.f32.mrb[0].mxu0
  %v159 = vadd.f32 %v72, %v158
  %v160 = vpop.f32.mrb[0].mxu0
  %v161 = vpop.f32.mrb[0].mxu0
  %v162 = vadd.f32 %v72, %v161
  %v163 = vpop.f32.mrb[0].mxu0
  %164 = vdwg.mxu0
  %v165 = vmax.f32 %v135, 0.0
  %v166 = vmax.f32 %v138, 0.0
  %v167 = vmax.f32 %v143, 0.0
  %v168 = vmax.f32 %v146, 0.0
  %v169 = vmax.f32 %v151, 0.0
  %v170 = vmax.f32 %v154, 0.0
  %v171 = vmax.f32 %v159, 0.0
  %v172 = vmax.f32 %v162, 0.0
  %v173 = vpack.c.bf16 %v166, %v165
  %v174 = vpack.c.bf16 %v168, %v167
  %v175 = vpack.c.bf16 %v170, %v169
  %v176 = vpack.c.bf16 %v172, %v171
  %v177 = vld [vmem:[%s4] sm:$0xf]
  %v178 = vld [vmem:[%s4 + $0x4] sm:$0xf]
  %v179 = vld [vmem:[%s4 + $0x8] sm:$0xf]
  %v180 = vld [vmem:[%s4 + $0xc] sm:$0xf]
  %v181 = vld [vmem:[%s4 + $0x10] sm:$0xf]
  %v182 = vld [vmem:[%s4 + $0x14] sm:$0xf]
  %v183 = vld [vmem:[%s4 + $0x18] sm:$0xf]
  %v184 = vld [vmem:[%s4 + $0x1c] sm:$0xf]
  %v185 = vld [vmem:[%s4 + $0x20] sm:$0xf]
  %v186 = vld [vmem:[%s4 + $0x24] sm:$0xf]
  %v187 = vld [vmem:[%s4 + $0x28] sm:$0xf]
  %v188 = vld [vmem:[%s4 + $0x2c] sm:$0xf]
  %v189 = vld [vmem:[%s4 + $0x30] sm:$0xf]
  %v190 = vld [vmem:[%s4 + $0x34] sm:$0xf]
  %v191 = vld [vmem:[%s4 + $0x38] sm:$0xf]
  %v192 = vld [vmem:[%s4 + $0x3c] sm:$0xf]
  %v193 = vld [vmem:[%s5] sm:$0x1]
  %v195 = vlaneseq
  %v196 = vshrl.u32 %v195, 7
  %v197 = vsub.s32 0, %v196
  %v198 = vrot.slane %v193, %v197
  %v216 = vunpack.c.l.b16 %v177
  %v217 = vunpack.c.l.b16 %v178
  %v218 = vunpack.c.l.b16 %v179
  %v219 = vunpack.c.l.b16 %v180
  %v220 = vunpack.c.l.b16 %v181
  %v221 = vunpack.c.l.b16 %v182
  %v222 = vunpack.c.l.b16 %v183
  %v223 = vunpack.c.l.b16 %v184
  %v224 = vunpack.c.l.b16 %v185
  %v225 = vunpack.c.l.b16 %v186
  %v226 = vunpack.c.l.b16 %v187
  %v227 = vunpack.c.l.b16 %v188
  %v228 = vunpack.c.l.b16 %v189
  %v229 = vunpack.c.l.b16 %v190
  %v230 = vunpack.c.l.b16 %v191
  %v231 = vunpack.c.l.b16 %v192
  %v232 = vpack.c.b16 %v217, %v216
  %v233 = vpack.c.b16 %v219, %v218
  %v234 = vpack.c.b16 %v221, %v220
  %v235 = vpack.c.b16 %v223, %v222
  %v236 = vpack.c.b16 %v225, %v224
  %v237 = vpack.c.b16 %v227, %v226
  %v238 = vpack.c.b16 %v229, %v228
  %v239 = vpack.c.b16 %v231, %v230
  %248 = vmatprep.subr.bf16.mxu0 0
  %249 = vmatpush1.bf16.msra.mxu0 %v232
  %250 = vmatprep.subr.bf16.mxu0 0
  %251 = vmatpush1.bf16.msra.mxu0 %v233
  %252 = vmatprep.subr.bf16.mxu0 0
  %253 = vmatpush1.bf16.msra.mxu0 %v234
  %254 = vmatprep.subr.bf16.mxu0 0
  %255 = vmatpush1.bf16.msra.mxu0 %v235
  %256 = vmatprep.subr.bf16.mxu0 0
  %257 = vmatpush1.bf16.msra.mxu0 %v236
  %258 = vmatprep.subr.bf16.mxu0 0
  %259 = vmatpush1.bf16.msra.mxu0 %v237
  %260 = vmatprep.subr.bf16.mxu0 0
  %261 = vmatpush1.bf16.msra.mxu0 %v238
  %262 = vmatprep.subr.bf16.mxu0 0
  %263 = vmatpush1.bf16.msra.mxu0 %v239
  %264 = vmatprep.subr.bf16.mxu0 0
  %265 = vmatpush1.bf16.msra.mxu0 0
  %266 = vmatprep.subr.bf16.mxu0 0
  %267 = vmatpush1.bf16.msra.mxu0 0
  %268 = vmatprep.subr.bf16.mxu0 0
  %269 = vmatpush1.bf16.msra.mxu0 0
  %270 = vmatprep.subr.bf16.mxu0 0
  %271 = vmatpush1.bf16.msra.mxu0 0
  %272 = vmatprep.subr.bf16.mxu0 0
  %273 = vmatpush1.bf16.msra.mxu0 0
  %274 = vmatprep.subr.bf16.mxu0 0
  %275 = vmatpush1.bf16.msra.mxu0 0
  %276 = vmatprep.subr.bf16.mxu0 0
  %277 = vmatpush1.bf16.msra.mxu0 0
  %278 = vmatprep.subr.bf16.mxu0 0
  %279 = vmatpush1.bf16.msra.mxu0 0
  %280 = vmatprep.mubr.bf16.mxu0 0
  %281 = vmatmul.mubr.bf16.gmra.mrb[0].mxu0 %v173
  %v282 = vpop.f32.mrb[0].mxu0
  %v283 = vadd.f32 %v198, %v282
  %v284 = vpop.f32.mrb[0].mxu0
  %v285 = vpop.f32.mrb[0].mxu0
  %v286 = vadd.f32 %v198, %v285
  %v287 = vpop.f32.mrb[0].mxu0
  %288 = vmatprep.mubr.bf16.mxu0 0
  %289 = vmatmul.mubr.bf16.gmra.mrb[0].mxu0 %v174
  %v290 = vpop.f32.mrb[0].mxu0
  %v291 = vadd.f32 %v198, %v290
  %v292 = vpop.f32.mrb[0].mxu0
  %v293 = vpop.f32.mrb[0].mxu0
  %v294 = vadd.f32 %v198, %v293
  %v295 = vpop.f32.mrb[0].mxu0
  %296 = vmatprep.mubr.bf16.mxu0 0
  %297 = vmatmul.mubr.bf16.gmra.mrb[0].mxu0 %v175
  %v298 = vpop.f32.mrb[0].mxu0
  %v299 = vadd.f32 %v198, %v298
  %v300 = vpop.f32.mrb[0].mxu0
  %v301 = vpop.f32.mrb[0].mxu0
  %v302 = vadd.f32 %v198, %v301
  %v303 = vpop.f32.mrb[0].mxu0
  %304 = vmatprep.mubr.bf16.mxu0 0
  %305 = vmatmul.mubr.bf16.gmra.mrb[0].mxu0 %v176
  %v306 = vpop.f32.mrb[0].mxu0
  %v307 = vadd.f32 %v198, %v306
  %v308 = vpop.f32.mrb[0].mxu0
  %v309 = vpop.f32.mrb[0].mxu0
  %v310 = vadd.f32 %v198, %v309
  %v311 = vpop.f32.mrb[0].mxu0
  %312 = vdwg.mxu0
  %v313 = vpack.c.bf16 %v286, %v283
  %v314 = vpack.c.bf16 %v294, %v291
  %v315 = vpack.c.bf16 %v302, %v299
  %v316 = vpack.c.bf16 %v310, %v307
  %v317 = vld [vmem:[%s6] sm:$0xff]
  %v318 = vld [vmem:[%s6 + $0x8] sm:$0xf]
  %v319 = vld [vmem:[%s6 + $0xc] sm:$0xff]
  %v320 = vld [vmem:[%s6 + $0x14] sm:$0xf]
  %v321 = vld [vmem:[%s6 + $0x18] sm:$0xff]
  %v322 = vld [vmem:[%s6 + $0x20] sm:$0xf]
  %v323 = vld [vmem:[%s6 + $0x24] sm:$0xff]
  %v324 = vld [vmem:[%s6 + $0x2c] sm:$0xf]
  %v325 = vld [vmem:[%s6 + $0x30] sm:$0xff]
  %v326 = vld [vmem:[%s6 + $0x38] sm:$0xf]
  %v327 = vld [vmem:[%s6 + $0x3c] sm:$0xff]
  %v328 = vld [vmem:[%s6 + $0x44] sm:$0xf]
  %v329 = vld [vmem:[%s6 + $0x48] sm:$0xff]
  %v330 = vld [vmem:[%s6 + $0x50] sm:$0xf]
  %v331 = vld [vmem:[%s6 + $0x54] sm:$0xff]
  %v332 = vld [vmem:[%s6 + $0x5c] sm:$0xf]
  %v333 = vld [vmem:[%s6 + $0x60] sm:$0xff]
  %v334 = vld [vmem:[%s6 + $0x68] sm:$0xf]
  %v335 = vld [vmem:[%s6 + $0x6c] sm:$0xff]
  %v336 = vld [vmem:[%s6 + $0x74] sm:$0xf]
  %v337 = vld [vmem:[%s6 + $0x78] sm:$0xff]
  %v338 = vld [vmem:[%s6 + $0x80] sm:$0xf]
  %v339 = vld [vmem:[%s6 + $0x84] sm:$0xff]
  %v340 = vld [vmem:[%s6 + $0x8c] sm:$0xf]
  %v341 = vld [vmem:[%s6 + $0x90] sm:$0xff]
  %v342 = vld [vmem:[%s6 + $0x98] sm:$0xf]
  %v343 = vld [vmem:[%s6 + $0x9c] sm:$0xff]
  %v344 = vld [vmem:[%s6 + $0xa4] sm:$0xf]
  %v345 = vld [vmem:[%s6 + $0xa8] sm:$0xff]
  %v346 = vld [vmem:[%s6 + $0xb0] sm:$0xf]
  %v347 = vld [vmem:[%s6 + $0xb4] sm:$0xff]
  %v348 = vld [vmem:[%s6 + $0xbc] sm:$0xf]
  %v349 = vld [vmem:[%s7] sm:$0x7]
  %v351 = vlaneseq
  %v352 = vshrl.u32 %v351, 7
  %v353 = vsub.s32 0, %v352
  %v354 = vrot.slane %v349, %v353
  %v355 = vlaneseq
  %v356 = vshrl.u32 %v355, 7
  %v357 = vsub.s32 1, %v356
  %v358 = vrot.slane %v349, %v357
  %v359 = vlaneseq
  %v360 = vshrl.u32 %v359, 7
  %v361 = vsub.s32 2, %v360
  %v362 = vrot.slane %v349, %v361
  %v398 = vunpack.c.l.b16 %v317
  %v399 = vunpack.c.h.b16 %v317
  %v400 = vunpack.c.l.b16 %v318
  %v401 = vunpack.c.l.b16 %v319
  %v402 = vunpack.c.h.b16 %v319
  %v403 = vunpack.c.l.b16 %v320
  %v404 = vunpack.c.l.b16 %v321
  %v405 = vunpack.c.h.b16 %v321
  %v406 = vunpack.c.l.b16 %v322
  %v407 = vunpack.c.l.b16 %v323
  %v408 = vunpack.c.h.b16 %v323
  %v409 = vunpack.c.l.b16 %v324
  %v410 = vunpack.c.l.b16 %v325
  %v411 = vunpack.c.h.b16 %v325
  %v412 = vunpack.c.l.b16 %v326
  %v413 = vunpack.c.l.b16 %v327
  %v414 = vunpack.c.h.b16 %v327
  %v415 = vunpack.c.l.b16 %v328
  %v416 = vunpack.c.l.b16 %v329
  %v417 = vunpack.c.h.b16 %v329
  %v418 = vunpack.c.l.b16 %v330
  %v419 = vunpack.c.l.b16 %v331
  %v420 = vunpack.c.h.b16 %v331
  %v421 = vunpack.c.l.b16 %v332
  %v422 = vunpack.c.l.b16 %v333
  %v423 = vunpack.c.h.b16 %v333
  %v424 = vunpack.c.l.b16 %v334
  %v425 = vunpack.c.l.b16 %v335
  %v426 = vunpack.c.h.b16 %v335
  %v427 = vunpack.c.l.b16 %v336
  %v428 = vunpack.c.l.b16 %v337
  %v429 = vunpack.c.h.b16 %v337
  %v430 = vunpack.c.l.b16 %v338
  %v431 = vunpack.c.l.b16 %v339
  %v432 = vunpack.c.h.b16 %v339
  %v433 = vunpack.c.l.b16 %v340
  %v434 = vunpack.c.l.b16 %v341
  %v435 = vunpack.c.h.b16 %v341
  %v436 = vunpack.c.l.b16 %v342
  %v437 = vunpack.c.l.b16 %v343
  %v438 = vunpack.c.h.b16 %v343
  %v439 = vunpack.c.l.b16 %v344
  %v440 = vunpack.c.l.b16 %v345
  %v441 = vunpack.c.h.b16 %v345
  %v442 = vunpack.c.l.b16 %v346
  %v443 = vunpack.c.l.b16 %v347
  %v444 = vunpack.c.h.b16 %v347
  %v445 = vunpack.c.l.b16 %v348
  %v446 = vpack.c.b16 %v401, %v398
  %v447 = vpack.c.b16 %v402, %v399
  %v448 = vpack.c.b16 %v403, %v400
  %v449 = vpack.c.b16 %v407, %v404
  %v450 = vpack.c.b16 %v408, %v405
  %v451 = vpack.c.b16 %v409, %v406
  %v452 = vpack.c.b16 %v413, %v410
  %v453 = vpack.c.b16 %v414, %v411
  %v454 = vpack.c.b16 %v415, %v412
  %v455 = vpack.c.b16 %v419, %v416
  %v456 = vpack.c.b16 %v420, %v417
  %v457 = vpack.c.b16 %v421, %v418
  %v458 = vpack.c.b16 %v425, %v422
  %v459 = vpack.c.b16 %v426, %v423
  %v460 = vpack.c.b16 %v427, %v424
  %v461 = vpack.c.b16 %v431, %v428
  %v462 = vpack.c.b16 %v432, %v429
  %v463 = vpack.c.b16 %v433, %v430
  %v464 = vpack.c.b16 %v437, %v434
  %v465 = vpack.c.b16 %v438, %v435
  %v466 = vpack.c.b16 %v439, %v436
  %v467 = vpack.c.b16 %v443, %v440
  %v468 = vpack.c.b16 %v444, %v441
  %v469 = vpack.c.b16 %v445, %v442
  %494 = vmatprep.subr.bf16.mxu0 %v447
  %495 = vmatpush1.bf16.msra.mxu0 %v446
  %496 = vmatprep.subr.bf16.mxu0 %v450
  %497 = vmatpush1.bf16.msra.mxu0 %v449
  %498 = vmatprep.subr.bf16.mxu0 %v453
  %499 = vmatpush1.bf16.msra.mxu0 %v452
  %500 = vmatprep.subr.bf16.mxu0 %v456
  %501 = vmatpush1.bf16.msra.mxu0 %v455
  %502 = vmatprep.subr.bf16.mxu0 %v459
  %503 = vmatpush1.bf16.msra.mxu0 %v458
  %504 = vmatprep.subr.bf16.mxu0 %v462
  %505 = vmatpush1.bf16.msra.mxu0 %v461
  %506 = vmatprep.subr.bf16.mxu0 %v465
  %507 = vmatpush1.bf16.msra.mxu0 %v464
  %508 = vmatprep.subr.bf16.mxu0 %v468
  %509 = vmatpush1.bf16.msra.mxu0 %v467
  %510 = vmatprep.subr.bf16.mxu0 0
  %511 = vmatpush1.bf16.msra.mxu0 0
  %512 = vmatprep.subr.bf16.mxu0 0
  %513 = vmatpush1.bf16.msra.mxu0 0
  %514 = vmatprep.subr.bf16.mxu0 0
  %515 = vmatpush1.bf16.msra.mxu0 0
  %516 = vmatprep.subr.bf16.mxu0 0
  %517 = vmatpush1.bf16.msra.mxu0 0
  %518 = vmatprep.subr.bf16.mxu0 0
  %519 = vmatpush1.bf16.msra.mxu0 0
  %520 = vmatprep.subr.bf16.mxu0 0
  %521 = vmatpush1.bf16.msra.mxu0 0
  %522 = vmatprep.subr.bf16.mxu0 0
  %523 = vmatpush1.bf16.msra.mxu0 0
  %524 = vmatprep.subr.bf16.mxu0 0
  %525 = vmatpush1.bf16.msra.mxu0 0
  %526 = vmatprep.mubr.bf16.mxu0 0
  %527 = vmatmul.mubr.bf16.gmra.mrb[0].mxu0 %v313
  %v528 = vpop.f32.mrb[0].mxu0
  %v529 = vadd.f32 %v354, %v528
  %v530 = vpop.f32.mrb[0].mxu0
  %v531 = vadd.f32 %v358, %v530
  %v532 = vpop.f32.mrb[0].mxu0
  %v533 = vadd.f32 %v354, %v532
  %v534 = vpop.f32.mrb[0].mxu0
  %v535 = vadd.f32 %v358, %v534
  %536 = vmatprep.mubr.bf16.mxu0 0
  %537 = vmatmul.mubr.bf16.gmra.mrb[0].mxu0 %v314
  %v538 = vpop.f32.mrb[0].mxu0
  %v539 = vadd.f32 %v354, %v538
  %v540 = vpop.f32.mrb[0].mxu0
  %v541 = vadd.f32 %v358, %v540
  %v542 = vpop.f32.mrb[0].mxu0
  %v543 = vadd.f32 %v354, %v542
  %v544 = vpop.f32.mrb[0].mxu0
  %v545 = vadd.f32 %v358, %v544
  %546 = vmatprep.mubr.bf16.mxu0 0
  %547 = vmatmul.mubr.bf16.gmra.mrb[0].mxu0 %v315
  %v548 = vpop.f32.mrb[0].mxu0
  %v549 = vadd.f32 %v354, %v548
  %v550 = vpop.f32.mrb[0].mxu0
  %v551 = vadd.f32 %v358, %v550
  %v552 = vpop.f32.mrb[0].mxu0
  %v553 = vadd.f32 %v354, %v552
  %v554 = vpop.f32.mrb[0].mxu0
  %v555 = vadd.f32 %v358, %v554
  %556 = vmatprep.mubr.bf16.mxu0 0
  %557 = vmatmul.mubr.bf16.gmra.mrb[0].mxu0 %v316
  %v558 = vpop.f32.mrb[0].mxu0
  %v559 = vadd.f32 %v354, %v558
  %v560 = vpop.f32.mrb[0].mxu0
  %v561 = vadd.f32 %v358, %v560
  %v562 = vpop.f32.mrb[0].mxu0
  %v563 = vadd.f32 %v354, %v562
  %v564 = vpop.f32.mrb[0].mxu0
  %v565 = vadd.f32 %v358, %v564
  %566 = vdwg.mxu0
  %567 = vmatprep.subr.bf16.mxu0 0
  %568 = vmatpush1.bf16.msra.mxu0 %v448
  %569 = vmatprep.subr.bf16.mxu0 0
  %570 = vmatpush1.bf16.msra.mxu0 %v451
  %571 = vmatprep.subr.bf16.mxu0 0
  %572 = vmatpush1.bf16.msra.mxu0 %v454
  %573 = vmatprep.subr.bf16.mxu0 0
  %574 = vmatpush1.bf16.msra.mxu0 %v457
  %575 = vmatprep.subr.bf16.mxu0 0
  %576 = vmatpush1.bf16.msra.mxu0 %v460
  %577 = vmatprep.subr.bf16.mxu0 0
  %578 = vmatpush1.bf16.msra.mxu0 %v463
  %579 = vmatprep.subr.bf16.mxu0 0
  %580 = vmatpush1.bf16.msra.mxu0 %v466
  %581 = vmatprep.subr.bf16.mxu0 0
  %582 = vmatpush1.bf16.msra.mxu0 %v469
  %583 = vmatprep.subr.bf16.mxu0 0
  %584 = vmatpush1.bf16.msra.mxu0 0
  %585 = vmatprep.subr.bf16.mxu0 0
  %586 = vmatpush1.bf16.msra.mxu0 0
  %587 = vmatprep.subr.bf16.mxu0 0
  %588 = vmatpush1.bf16.msra.mxu0 0
  %589 = vmatprep.subr.bf16.mxu0 0
  %590 = vmatpush1.bf16.msra.mxu0 0
  %591 = vmatprep.subr.bf16.mxu0 0
  %592 = vmatpush1.bf16.msra.mxu0 0
  %593 = vmatprep.subr.bf16.mxu0 0
  %594 = vmatpush1.bf16.msra.mxu0 0
  %595 = vmatprep.subr.bf16.mxu0 0
  %596 = vmatpush1.bf16.msra.mxu0 0
  %597 = vmatprep.subr.bf16.mxu0 0
  %598 = vmatpush1.bf16.msra.mxu0 0
  %599 = vmatprep.mubr.bf16.mxu0 0
  %600 = vmatmul.mubr.bf16.gmra.mrb[0].mxu0 %v313
  %v601 = vpop.f32.mrb[0].mxu0
  %v602 = vadd.f32 %v362, %v601
  %v603 = vpop.f32.mrb[0].mxu0
  %v604 = vpop.f32.mrb[0].mxu0
  %v605 = vadd.f32 %v362, %v604
  %v606 = vpop.f32.mrb[0].mxu0
  %607 = vmatprep.mubr.bf16.mxu0 0
  %608 = vmatmul.mubr.bf16.gmra.mrb[0].mxu0 %v314
  %v609 = vpop.f32.mrb[0].mxu0
  %v610 = vadd.f32 %v362, %v609
  %v611 = vpop.f32.mrb[0].mxu0
  %v612 = vpop.f32.mrb[0].mxu0
  %v613 = vadd.f32 %v362, %v612
  %v614 = vpop.f32.mrb[0].mxu0
  %615 = vmatprep.mubr.bf16.mxu0 0
  %616 = vmatmul.mubr.bf16.gmra.mrb[0].mxu0 %v315
  %v617 = vpop.f32.mrb[0].mxu0
  %v618 = vadd.f32 %v362, %v617
  %v619 = vpop.f32.mrb[0].mxu0
  %v620 = vpop.f32.mrb[0].mxu0
  %v621 = vadd.f32 %v362, %v620
  %v622 = vpop.f32.mrb[0].mxu0
  %623 = vmatprep.mubr.bf16.mxu0 0
  %624 = vmatmul.mubr.bf16.gmra.mrb[0].mxu0 %v316
  %v625 = vpop.f32.mrb[0].mxu0
  %v626 = vadd.f32 %v362, %v625
  %v627 = vpop.f32.mrb[0].mxu0
  %v628 = vpop.f32.mrb[0].mxu0
  %v629 = vadd.f32 %v362, %v628
  %v630 = vpop.f32.mrb[0].mxu0
  %631 = vdwg.mxu0
  %632 = vst [vmem:[#allocation2] sm:$0xff] %v529
  %633 = vst [vmem:[#allocation2 + $0x8] sm:$0xff] %v531
  %634 = vst [vmem:[#allocation2 + $0x10] sm:$0xff] %v602
  %635 = vst [vmem:[#allocation2 + $0x18] sm:$0xff] %v533
  %636 = vst [vmem:[#allocation2 + $0x20] sm:$0xff] %v535
  %637 = vst [vmem:[#allocation2 + $0x28] sm:$0xff] %v605
  %638 = vst [vmem:[#allocation2 + $0x30] sm:$0xff] %v539
  %639 = vst [vmem:[#allocation2 + $0x38] sm:$0xff] %v541
  %640 = vst [vmem:[#allocation2 + $0x40] sm:$0xff] %v610
  %641 = vst [vmem:[#allocation2 + $0x48] sm:$0xff] %v543
  %642 = vst [vmem:[#allocation2 + $0x50] sm:$0xff] %v545
  %643 = vst [vmem:[#allocation2 + $0x58] sm:$0xff] %v613
  %644 = vst [vmem:[#allocation2 + $0x60] sm:$0xff] %v549
  %645 = vst [vmem:[#allocation2 + $0x68] sm:$0xff] %v551
  %646 = vst [vmem:[#allocation2 + $0x70] sm:$0xff] %v618
  %647 = vst [vmem:[#allocation2 + $0x78] sm:$0xff] %v553
  %648 = vst [vmem:[#allocation2 + $0x80] sm:$0xff] %v555
  %649 = vst [vmem:[#allocation2 + $0x88] sm:$0xff] %v621
  %650 = vst [vmem:[#allocation2 + $0x90] sm:$0xff] %v559
  %651 = vst [vmem:[#allocation2 + $0x98] sm:$0xff] %v561
  %652 = vst [vmem:[#allocation2 + $0xa0] sm:$0xff] %v626
  %653 = vst [vmem:[#allocation2 + $0xa8] sm:$0xff] %v563
  %654 = vst [vmem:[#allocation2 + $0xb0] sm:$0xff] %v565
  %655 = vst [vmem:[#allocation2 + $0xb8] sm:$0xff] %v629
  loop: start=0, step=1, limit=8
  $region54: #{forward.1} parent=0 // loop_pre_header
    _
  $region55: #{forward.1} parent=0 // loop_header
    %s657 = sphi 0, %s661
    %p658 = scmp.ge.s32.totalorder %s657, 8
    %v662 = vphi 0.0, %v1481
  $region56: #{forward.1} parent=0 // loop_header_branch
    %660 = sbr.rel (%p658) target = $region60
  $region57: #{forward.1} parent=0 // loop_body
    %s663 = sld [smem:[#allocation5 + %s657]]
    %p664 = scmp.eq.s32.totalorder %s663, 1
    // Predicated region
    $region61: #{forward.1} parent=57 // pred_check
      %p665 = pneg %p664
    $region62: #{forward.1} parent=57 // pred_check_branch
      %667 = sbr.rel (%p665) target = $region64
    $region63: #{forward.1} parent=57 // pred_region
      %v668 = vpack.c.bf16 %v662, %v662
      %v669 = vld [vmem:[%s10] sm:$0xff]
      %v670 = vld [vmem:[%s10 + $0x8] sm:$0xff]
      %v671 = vld [vmem:[%s10 + $0x10] sm:$0xff]
      %v672 = vld [vmem:[%s10 + $0x18] sm:$0xff]
      %v673 = vld [vmem:[%s10 + $0x20] sm:$0xff]
      %v674 = vld [vmem:[%s10 + $0x28] sm:$0xff]
      %v675 = vld [vmem:[%s10 + $0x30] sm:$0xff]
      %v676 = vld [vmem:[%s10 + $0x38] sm:$0xff]
      %v677 = vld [vmem:[%s10 + $0x40] sm:$0xff]
      %v678 = vld [vmem:[%s10 + $0x48] sm:$0xff]
      %v679 = vld [vmem:[%s10 + $0x50] sm:$0xff]
      %v680 = vld [vmem:[%s10 + $0x58] sm:$0xff]
      %v681 = vld [vmem:[%s10 + $0x60] sm:$0xff]
      %v682 = vld [vmem:[%s10 + $0x68] sm:$0xff]
      %v683 = vld [vmem:[%s10 + $0x70] sm:$0xff]
      %v684 = vld [vmem:[%s10 + $0x78] sm:$0xff]
      %v701 = vunpack.c.l.b16 %v669
      %v702 = vunpack.c.h.b16 %v669
      %v703 = vunpack.c.l.b16 %v670
      %v704 = vunpack.c.h.b16 %v670
      %v705 = vunpack.c.l.b16 %v671
      %v706 = vunpack.c.h.b16 %v671
      %v707 = vunpack.c.l.b16 %v672
      %v708 = vunpack.c.h.b16 %v672
      %v709 = vunpack.c.l.b16 %v673
      %v710 = vunpack.c.h.b16 %v673
      %v711 = vunpack.c.l.b16 %v674
      %v712 = vunpack.c.h.b16 %v674
      %v713 = vunpack.c.l.b16 %v675
      %v714 = vunpack.c.h.b16 %v675
      %v715 = vunpack.c.l.b16 %v676
      %v716 = vunpack.c.h.b16 %v676
      %v717 = vunpack.c.l.b16 %v677
      %v718 = vunpack.c.h.b16 %v677
      %v719 = vunpack.c.l.b16 %v678
      %v720 = vunpack.c.h.b16 %v678
      %v721 = vunpack.c.l.b16 %v679
      %v722 = vunpack.c.h.b16 %v679
      %v723 = vunpack.c.l.b16 %v680
      %v724 = vunpack.c.h.b16 %v680
      %v725 = vunpack.c.l.b16 %v681
      %v726 = vunpack.c.h.b16 %v681
      %v727 = vunpack.c.l.b16 %v682
      %v728 = vunpack.c.h.b16 %v682
      %v729 = vunpack.c.l.b16 %v683
      %v730 = vunpack.c.h.b16 %v683
      %v731 = vunpack.c.l.b16 %v684
      %v732 = vunpack.c.h.b16 %v684
      %v733 = vpack.c.b16 %v703, %v701
      %v734 = vpack.c.b16 %v704, %v702
      %v735 = vpack.c.b16 %v707, %v705
      %v736 = vpack.c.b16 %v708, %v706
      %v737 = vpack.c.b16 %v711, %v709
      %v738 = vpack.c.b16 %v712, %v710
      %v739 = vpack.c.b16 %v715, %v713
      %v740 = vpack.c.b16 %v716, %v714
      %v741 = vpack.c.b16 %v719, %v717
      %v742 = vpack.c.b16 %v720, %v718
      %v743 = vpack.c.b16 %v723, %v721
      %v744 = vpack.c.b16 %v724, %v722
      %v745 = vpack.c.b16 %v727, %v725
      %v746 = vpack.c.b16 %v728, %v726
      %v747 = vpack.c.b16 %v731, %v729
      %v748 = vpack.c.b16 %v732, %v730
      %765 = vmatprep.subr.bf16.mxu0 %v734
      %766 = vmatpush1.bf16.msra.mxu0 %v733
      %767 = vmatprep.subr.bf16.mxu0 %v736
      %768 = vmatpush1.bf16.msra.mxu0 %v735
      %769 = vmatprep.subr.bf16.mxu0 %v738
      %770 = vmatpush1.bf16.msra.mxu0 %v737
      %771 = vmatprep.subr.bf16.mxu0 %v740
      %772 = vmatpush1.bf16.msra.mxu0 %v739
      %773 = vmatprep.subr.bf16.mxu0 %v742
      %774 = vmatpush1.bf16.msra.mxu0 %v741
      %775 = vmatprep.subr.bf16.mxu0 %v744
      %776 = vmatpush1.bf16.msra.mxu0 %v743
      %777 = vmatprep.subr.bf16.mxu0 %v746
      %778 = vmatpush1.bf16.msra.mxu0 %v745
      %779 = vmatprep.subr.bf16.mxu0 %v748
      %780 = vmatpush1.bf16.msra.mxu0 %v747
      %781 = vmatprep.subr.bf16.mxu0 0
      %782 = vmatpush1.bf16.msra.mxu0 0
      %783 = vmatprep.subr.bf16.mxu0 0
      %784 = vmatpush1.bf16.msra.mxu0 0
      %785 = vmatprep.subr.bf16.mxu0 0
      %786 = vmatpush1.bf16.msra.mxu0 0
      %787 = vmatprep.subr.bf16.mxu0 0
      %788 = vmatpush1.bf16.msra.mxu0 0
      %789 = vmatprep.subr.bf16.mxu0 0
      %790 = vmatpush1.bf16.msra.mxu0 0
      %791 = vmatprep.subr.bf16.mxu0 0
      %792 = vmatpush1.bf16.msra.mxu0 0
      %793 = vmatprep.subr.bf16.mxu0 0
      %794 = vmatpush1.bf16.msra.mxu0 0
      %795 = vmatprep.subr.bf16.mxu0 0
      %796 = vmatpush1.bf16.msra.mxu0 0
      %797 = vmatprep.mubr.bf16.mxu0 0
      %798 = vmatmul.mubr.bf16.gmra.mrb[0].mxu0 %v668
      %v799 = vpop.f32.mrb[0].mxu0
      %v800 = vadd.f32 0.0, %v799
      %v801 = vpop.f32.mrb[0].mxu0
      %v802 = vadd.f32 0.0, %v801
      %v803 = vpop.f32.mrb[0].mxu0
      %v804 = vpop.f32.mrb[0].mxu0
      %805 = vdwg.mxu0
      %v806 = vxor.u32 %v800, 2147483648
      %v807 = vmul.f32 %v806, 1.442695
      %v808 = vpow.pop %v807
      %v809 = vadd.f32 %v808, 1.0
      %v810 = vrcp.pop %v809
      %v811 = vmul.f32 1.0, %v810
      %v812 = vxor.u32 %v802, 2147483648
      %v813 = vmul.f32 %v812, 1.442695
      %v814 = vpow.pop %v813
      %v815 = vadd.f32 %v814, 1.0
      %v816 = vrcp.pop %v815
      %v817 = vmul.f32 1.0, %v816
      %v818 = vmul.f32 %v811, %v662
      %v819 = vpack.c.bf16 %v818, %v818
      %v820 = vld [vmem:[%s11] sm:$0xf]
      %v821 = vld [vmem:[%s11 + $0x4] sm:$0xf]
      %v822 = vld [vmem:[%s11 + $0x8] sm:$0xf]
      %v823 = vld [vmem:[%s11 + $0xc] sm:$0xf]
      %v824 = vld [vmem:[%s11 + $0x10] sm:$0xf]
      %v825 = vld [vmem:[%s11 + $0x14] sm:$0xf]
      %v826 = vld [vmem:[%s11 + $0x18] sm:$0xf]
      %v827 = vld [vmem:[%s11 + $0x1c] sm:$0xf]
      %v828 = vld [vmem:[%s11 + $0x20] sm:$0xf]
      %v829 = vld [vmem:[%s11 + $0x24] sm:$0xf]
      %v830 = vld [vmem:[%s11 + $0x28] sm:$0xf]
      %v831 = vld [vmem:[%s11 + $0x2c] sm:$0xf]
      %v832 = vld [vmem:[%s11 + $0x30] sm:$0xf]
      %v833 = vld [vmem:[%s11 + $0x34] sm:$0xf]
      %v834 = vld [vmem:[%s11 + $0x38] sm:$0xf]
      %v835 = vld [vmem:[%s11 + $0x3c] sm:$0xf]
      %v852 = vunpack.c.l.b16 %v820
      %v853 = vunpack.c.l.b16 %v821
      %v854 = vunpack.c.l.b16 %v822
      %v855 = vunpack.c.l.b16 %v823
      %v856 = vunpack.c.l.b16 %v824
      %v857 = vunpack.c.l.b16 %v825
      %v858 = vunpack.c.l.b16 %v826
      %v859 = vunpack.c.l.b16 %v827
      %v860 = vunpack.c.l.b16 %v828
      %v861 = vunpack.c.l.b16 %v829
      %v862 = vunpack.c.l.b16 %v830
      %v863 = vunpack.c.l.b16 %v831
      %v864 = vunpack.c.l.b16 %v832
      %v865 = vunpack.c.l.b16 %v833
      %v866 = vunpack.c.l.b16 %v834
      %v867 = vunpack.c.l.b16 %v835
      %v868 = vpack.c.b16 %v853, %v852
      %v869 = vpack.c.b16 %v855, %v854
      %v870 = vpack.c.b16 %v857, %v856
      %v871 = vpack.c.b16 %v859, %v858
      %v872 = vpack.c.b16 %v861, %v860
      %v873 = vpack.c.b16 %v863, %v862
      %v874 = vpack.c.b16 %v865, %v864
      %v875 = vpack.c.b16 %v867, %v866
      %884 = vmatprep.subr.bf16.mxu0 0
      %885 = vmatpush1.bf16.msra.mxu0 %v868
      %886 = vmatprep.subr.bf16.mxu0 0
      %887 = vmatpush1.bf16.msra.mxu0 %v869
      %888 = vmatprep.subr.bf16.mxu0 0
      %889 = vmatpush1.bf16.msra.mxu0 %v870
      %890 = vmatprep.subr.bf16.mxu0 0
      %891 = vmatpush1.bf16.msra.mxu0 %v871
      %892 = vmatprep.subr.bf16.mxu0 0
      %893 = vmatpush1.bf16.msra.mxu0 %v872
      %894 = vmatprep.subr.bf16.mxu0 0
      %895 = vmatpush1.bf16.msra.mxu0 %v873
      %896 = vmatprep.subr.bf16.mxu0 0
      %897 = vmatpush1.bf16.msra.mxu0 %v874
      %898 = vmatprep.subr.bf16.mxu0 0
      %899 = vmatpush1.bf16.msra.mxu0 %v875
      %900 = vmatprep.subr.bf16.mxu0 0
      %901 = vmatpush1.bf16.msra.mxu0 0
      %902 = vmatprep.subr.bf16.mxu0 0
      %903 = vmatpush1.bf16.msra.mxu0 0
      %904 = vmatprep.subr.bf16.mxu0 0
      %905 = vmatpush1.bf16.msra.mxu0 0
      %906 = vmatprep.subr.bf16.mxu0 0
      %907 = vmatpush1.bf16.msra.mxu0 0
      %908 = vmatprep.subr.bf16.mxu0 0
      %909 = vmatpush1.bf16.msra.mxu0 0
      %910 = vmatprep.subr.bf16.mxu0 0
      %911 = vmatpush1.bf16.msra.mxu0 0
      %912 = vmatprep.subr.bf16.mxu0 0
      %913 = vmatpush1.bf16.msra.mxu0 0
      %914 = vmatprep.subr.bf16.mxu0 0
      %915 = vmatpush1.bf16.msra.mxu0 0
      %916 = vmatprep.mubr.bf16.mxu0 0
      %917 = vmatmul.mubr.bf16.gmra.mrb[0].mxu0 %v819
      %v918 = vpop.f32.mrb[0].mxu0
      %v919 = vadd.f32 0.0, %v918
      %v920 = vpop.f32.mrb[0].mxu0
      %v921 = vpop.f32.mrb[0].mxu0
      %v922 = vpop.f32.mrb[0].mxu0
      %923 = vdwg.mxu0
      %v924 = vtanh.pop %v919
      %v925 = vsub.f32 1.0, %v817
      %v926 = vsub.f32 %v924, %v662
      %v927 = vmul.f32 %v925, %v926
      %v928 = vadd.f32 %v662, %v927
    $region64: #{forward.1} parent=57 // pred_fallthru
      %v929 = vphi 0, %v928
    %p930 = pneg %p664
    // Predicated region
    $region65: #{forward.1} parent=57 // pred_check
      _
    $region66: #{forward.1} parent=57 // pred_check_branch
      %932 = sbr.rel (%p664) target = $region68
    $region67: #{forward.1} parent=57 // pred_region
      // While loop
      $region69: #{forward.1} parent=67 // loop_pre_header
        _
      $region70: #{forward.1} parent=67 // loop_header
        %s934 = sphi 0, %s936
        %p935 = scmp.ge.s32.totalorder %s934, %s663
        %v939 = vphi %v662, %v1200
      $region71: #{forward.1} parent=67 // loop_header_branch
        %938 = sbr.rel (%p935) target = $region75
      $region72: #{forward.1} parent=67 // loop_body
        %v940 = vpack.c.bf16 %v939, %v939
        %v941 = vld [vmem:[%s10] sm:$0xff]
        %v942 = vld [vmem:[%s10 + $0x8] sm:$0xff]
        %v943 = vld [vmem:[%s10 + $0x10] sm:$0xff]
        %v944 = vld [vmem:[%s10 + $0x18] sm:$0xff]
        %v945 = vld [vmem:[%s10 + $0x20] sm:$0xff]
        %v946 = vld [vmem:[%s10 + $0x28] sm:$0xff]
        %v947 = vld [vmem:[%s10 + $0x30] sm:$0xff]
        %v948 = vld [vmem:[%s10 + $0x38] sm:$0xff]
        %v949 = vld [vmem:[%s10 + $0x40] sm:$0xff]
        %v950 = vld [vmem:[%s10 + $0x48] sm:$0xff]
        %v951 = vld [vmem:[%s10 + $0x50] sm:$0xff]
        %v952 = vld [vmem:[%s10 + $0x58] sm:$0xff]
        %v953 = vld [vmem:[%s10 + $0x60] sm:$0xff]
        %v954 = vld [vmem:[%s10 + $0x68] sm:$0xff]
        %v955 = vld [vmem:[%s10 + $0x70] sm:$0xff]
        %v956 = vld [vmem:[%s10 + $0x78] sm:$0xff]
        %v973 = vunpack.c.l.b16 %v941
        %v974 = vunpack.c.h.b16 %v941
        %v975 = vunpack.c.l.b16 %v942
        %v976 = vunpack.c.h.b16 %v942
        %v977 = vunpack.c.l.b16 %v943
        %v978 = vunpack.c.h.b16 %v943
        %v979 = vunpack.c.l.b16 %v944
        %v980 = vunpack.c.h.b16 %v944
        %v981 = vunpack.c.l.b16 %v945
        %v982 = vunpack.c.h.b16 %v945
        %v983 = vunpack.c.l.b16 %v946
        %v984 = vunpack.c.h.b16 %v946
        %v985 = vunpack.c.l.b16 %v947
        %v986 = vunpack.c.h.b16 %v947
        %v987 = vunpack.c.l.b16 %v948
        %v988 = vunpack.c.h.b16 %v948
        %v989 = vunpack.c.l.b16 %v949
        %v990 = vunpack.c.h.b16 %v949
        %v991 = vunpack.c.l.b16 %v950
        %v992 = vunpack.c.h.b16 %v950
        %v993 = vunpack.c.l.b16 %v951
        %v994 = vunpack.c.h.b16 %v951
        %v995 = vunpack.c.l.b16 %v952
        %v996 = vunpack.c.h.b16 %v952
        %v997 = vunpack.c.l.b16 %v953
        %v998 = vunpack.c.h.b16 %v953
        %v999 = vunpack.c.l.b16 %v954
        %v1000 = vunpack.c.h.b16 %v954
        %v1001 = vunpack.c.l.b16 %v955
        %v1002 = vunpack.c.h.b16 %v955
        %v1003 = vunpack.c.l.b16 %v956
        %v1004 = vunpack.c.h.b16 %v956
        %v1005 = vpack.c.b16 %v975, %v973
        %v1006 = vpack.c.b16 %v976, %v974
        %v1007 = vpack.c.b16 %v979, %v977
        %v1008 = vpack.c.b16 %v980, %v978
        %v1009 = vpack.c.b16 %v983, %v981
        %v1010 = vpack.c.b16 %v984, %v982
        %v1011 = vpack.c.b16 %v987, %v985
        %v1012 = vpack.c.b16 %v988, %v986
        %v1013 = vpack.c.b16 %v991, %v989
        %v1014 = vpack.c.b16 %v992, %v990
        %v1015 = vpack.c.b16 %v995, %v993
        %v1016 = vpack.c.b16 %v996, %v994
        %v1017 = vpack.c.b16 %v999, %v997
        %v1018 = vpack.c.b16 %v1000, %v998
        %v1019 = vpack.c.b16 %v1003, %v1001
        %v1020 = vpack.c.b16 %v1004, %v1002
        %1037 = vmatprep.subr.bf16.mxu0 %v1006
        %1038 = vmatpush1.bf16.msra.mxu0 %v1005
        %1039 = vmatprep.subr.bf16.mxu0 %v1008
        %1040 = vmatpush1.bf16.msra.mxu0 %v1007
        %1041 = vmatprep.subr.bf16.mxu0 %v1010
        %1042 = vmatpush1.bf16.msra.mxu0 %v1009
        %1043 = vmatprep.subr.bf16.mxu0 %v1012
        %1044 = vmatpush1.bf16.msra.mxu0 %v1011
        %1045 = vmatprep.subr.bf16.mxu0 %v1014
        %1046 = vmatpush1.bf16.msra.mxu0 %v1013
        %1047 = vmatprep.subr.bf16.mxu0 %v1016
        %1048 = vmatpush1.bf16.msra.mxu0 %v1015
        %1049 = vmatprep.subr.bf16.mxu0 %v1018
        %1050 = vmatpush1.bf16.msra.mxu0 %v1017
        %1051 = vmatprep.subr.bf16.mxu0 %v1020
        %1052 = vmatpush1.bf16.msra.mxu0 %v1019
        %1053 = vmatprep.subr.bf16.mxu0 0
        %1054 = vmatpush1.bf16.msra.mxu0 0
        %1055 = vmatprep.subr.bf16.mxu0 0
        %1056 = vmatpush1.bf16.msra.mxu0 0
        %1057 = vmatprep.subr.bf16.mxu0 0
        %1058 = vmatpush1.bf16.msra.mxu0 0
        %1059 = vmatprep.subr.bf16.mxu0 0
        %1060 = vmatpush1.bf16.msra.mxu0 0
        %1061 = vmatprep.subr.bf16.mxu0 0
        %1062 = vmatpush1.bf16.msra.mxu0 0
        %1063 = vmatprep.subr.bf16.mxu0 0
        %1064 = vmatpush1.bf16.msra.mxu0 0
        %1065 = vmatprep.subr.bf16.mxu0 0
        %1066 = vmatpush1.bf16.msra.mxu0 0
        %1067 = vmatprep.subr.bf16.mxu0 0
        %1068 = vmatpush1.bf16.msra.mxu0 0
        %1069 = vmatprep.mubr.bf16.mxu0 0
        %1070 = vmatmul.mubr.bf16.gmra.mrb[0].mxu0 %v940
        %v1071 = vpop.f32.mrb[0].mxu0
        %v1072 = vadd.f32 0.0, %v1071
        %v1073 = vpop.f32.mrb[0].mxu0
        %v1074 = vadd.f32 0.0, %v1073
        %v1075 = vpop.f32.mrb[0].mxu0
        %v1076 = vpop.f32.mrb[0].mxu0
        %1077 = vdwg.mxu0
        %v1078 = vxor.u32 %v1072, 2147483648
        %v1079 = vmul.f32 %v1078, 1.442695
        %v1080 = vpow.pop %v1079
        %v1081 = vadd.f32 %v1080, 1.0
        %v1082 = vrcp.pop %v1081
        %v1083 = vmul.f32 1.0, %v1082
        %v1084 = vxor.u32 %v1074, 2147483648
        %v1085 = vmul.f32 %v1084, 1.442695
        %v1086 = vpow.pop %v1085
        %v1087 = vadd.f32 %v1086, 1.0
        %v1088 = vrcp.pop %v1087
        %v1089 = vmul.f32 1.0, %v1088
        %v1090 = vmul.f32 %v1083, %v939
        %v1091 = vpack.c.bf16 %v1090, %v1090
        %v1092 = vld [vmem:[%s11] sm:$0xf]
        %v1093 = vld [vmem:[%s11 + $0x4] sm:$0xf]
        %v1094 = vld [vmem:[%s11 + $0x8] sm:$0xf]
        %v1095 = vld [vmem:[%s11 + $0xc] sm:$0xf]
        %v1096 = vld [vmem:[%s11 + $0x10] sm:$0xf]
        %v1097 = vld [vmem:[%s11 + $0x14] sm:$0xf]
        %v1098 = vld [vmem:[%s11 + $0x18] sm:$0xf]
        %v1099 = vld [vmem:[%s11 + $0x1c] sm:$0xf]
        %v1100 = vld [vmem:[%s11 + $0x20] sm:$0xf]
        %v1101 = vld [vmem:[%s11 + $0x24] sm:$0xf]
        %v1102 = vld [vmem:[%s11 + $0x28] sm:$0xf]
        %v1103 = vld [vmem:[%s11 + $0x2c] sm:$0xf]
        %v1104 = vld [vmem:[%s11 + $0x30] sm:$0xf]
        %v1105 = vld [vmem:[%s11 + $0x34] sm:$0xf]
        %v1106 = vld [vmem:[%s11 + $0x38] sm:$0xf]
        %v1107 = vld [vmem:[%s11 + $0x3c] sm:$0xf]
        %v1124 = vunpack.c.l.b16 %v1092
        %v1125 = vunpack.c.l.b16 %v1093
        %v1126 = vunpack.c.l.b16 %v1094
        %v1127 = vunpack.c.l.b16 %v1095
        %v1128 = vunpack.c.l.b16 %v1096
        %v1129 = vunpack.c.l.b16 %v1097
        %v1130 = vunpack.c.l.b16 %v1098
        %v1131 = vunpack.c.l.b16 %v1099
        %v1132 = vunpack.c.l.b16 %v1100
        %v1133 = vunpack.c.l.b16 %v1101
        %v1134 = vunpack.c.l.b16 %v1102
        %v1135 = vunpack.c.l.b16 %v1103
        %v1136 = vunpack.c.l.b16 %v1104
        %v1137 = vunpack.c.l.b16 %v1105
        %v1138 = vunpack.c.l.b16 %v1106
        %v1139 = vunpack.c.l.b16 %v1107
        %v1140 = vpack.c.b16 %v1125, %v1124
        %v1141 = vpack.c.b16 %v1127, %v1126
        %v1142 = vpack.c.b16 %v1129, %v1128
        %v1143 = vpack.c.b16 %v1131, %v1130
        %v1144 = vpack.c.b16 %v1133, %v1132
        %v1145 = vpack.c.b16 %v1135, %v1134
        %v1146 = vpack.c.b16 %v1137, %v1136
        %v1147 = vpack.c.b16 %v1139, %v1138
        %1156 = vmatprep.subr.bf16.mxu0 0
        %1157 = vmatpush1.bf16.msra.mxu0 %v1140
        %1158 = vmatprep.subr.bf16.mxu0 0
        %1159 = vmatpush1.bf16.msra.mxu0 %v1141
        %1160 = vmatprep.subr.bf16.mxu0 0
        %1161 = vmatpush1.bf16.msra.mxu0 %v1142
        %1162 = vmatprep.subr.bf16.mxu0 0
        %1163 = vmatpush1.bf16.msra.mxu0 %v1143
        %1164 = vmatprep.subr.bf16.mxu0 0
        %1165 = vmatpush1.bf16.msra.mxu0 %v1144
        %1166 = vmatprep.subr.bf16.mxu0 0
        %1167 = vmatpush1.bf16.msra.mxu0 %v1145
        %1168 = vmatprep.subr.bf16.mxu0 0
        %1169 = vmatpush1.bf16.msra.mxu0 %v1146
        %1170 = vmatprep.subr.bf16.mxu0 0
        %1171 = vmatpush1.bf16.msra.mxu0 %v1147
        %1172 = vmatprep.subr.bf16.mxu0 0
        %1173 = vmatpush1.bf16.msra.mxu0 0
        %1174 = vmatprep.subr.bf16.mxu0 0
        %1175 = vmatpush1.bf16.msra.mxu0 0
        %1176 = vmatprep.subr.bf16.mxu0 0
        %1177 = vmatpush1.bf16.msra.mxu0 0
        %1178 = vmatprep.subr.bf16.mxu0 0
        %1179 = vmatpush1.bf16.msra.mxu0 0
        %1180 = vmatprep.subr.bf16.mxu0 0
        %1181 = vmatpush1.bf16.msra.mxu0 0
        %1182 = vmatprep.subr.bf16.mxu0 0
        %1183 = vmatpush1.bf16.msra.mxu0 0
        %1184 = vmatprep.subr.bf16.mxu0 0
        %1185 = vmatpush1.bf16.msra.mxu0 0
        %1186 = vmatprep.subr.bf16.mxu0 0
        %1187 = vmatpush1.bf16.msra.mxu0 0
        %1188 = vmatprep.mubr.bf16.mxu0 0
        %1189 = vmatmul.mubr.bf16.gmra.mrb[0].mxu0 %v1091
        %v1190 = vpop.f32.mrb[0].mxu0
        %v1191 = vadd.f32 0.0, %v1190
        %v1192 = vpop.f32.mrb[0].mxu0
        %v1193 = vpop.f32.mrb[0].mxu0
        %v1194 = vpop.f32.mrb[0].mxu0
        %1195 = vdwg.mxu0
        %v1196 = vtanh.pop %v1191
        %v1197 = vsub.f32 1.0, %v1089
        %v1198 = vsub.f32 %v1196, %v939
        %v1199 = vmul.f32 %v1197, %v1198
        %v1200 = vadd.f32 %v939, %v1199
      $region73: #{forward.1} parent=67 // loop_footer
        %s936 = sadd.s32 %s934, 1
      $region74: #{forward.1} parent=67 // loop_footer_branch
        %933 = sbr.rel target = $region70
      $region75: #{forward.1} parent=67 // loop_exit
        _
    $region68: #{forward.1} parent=57 // pred_fallthru
      %v1201 = vphi %v929, %v939
    %s1202 = smul.u32 %s657, 8
    %s1203 = sshra.s32 %s1202, 3
    %s1204 = sand.u32 %s1202, 7
    %s1205 = smul.u32 %s1203, 3
    %s1206 = smul.addr %s1205, 8
    %s1207 = scalar_lea.vmem [#allocation2], %s1206
    %v1208 = vld [vmem:[%s1207] sm:$0xff]
    %v1209 = vld [vmem:[%s1207 + $0x8] sm:$0xff]
    %v1210 = vld [vmem:[%s1207 + $0x10] sm:$0xff]
    %v1211 = vpack.c.bf16 %v1201, %v1201
    %v1212 = vld [vmem:[%s8] sm:$0xff]
    %v1213 = vld [vmem:[%s8 + $0x8] sm:$0xf]
    %v1214 = vld [vmem:[%s8 + $0xc] sm:$0xff]
    %v1215 = vld [vmem:[%s8 + $0x14] sm:$0xf]
    %v1216 = vld [vmem:[%s8 + $0x18] sm:$0xff]
    %v1217 = vld [vmem:[%s8 + $0x20] sm:$0xf]
    %v1218 = vld [vmem:[%s8 + $0x24] sm:$0xff]
    %v1219 = vld [vmem:[%s8 + $0x2c] sm:$0xf]
    %v1220 = vld [vmem:[%s8 + $0x30] sm:$0xff]
    %v1221 = vld [vmem:[%s8 + $0x38] sm:$0xf]
    %v1222 = vld [vmem:[%s8 + $0x3c] sm:$0xff]
    %v1223 = vld [vmem:[%s8 + $0x44] sm:$0xf]
    %v1224 = vld [vmem:[%s8 + $0x48] sm:$0xff]
    %v1225 = vld [vmem:[%s8 + $0x50] sm:$0xf]
    %v1226 = vld [vmem:[%s8 + $0x54] sm:$0xff]
    %v1227 = vld [vmem:[%s8 + $0x5c] sm:$0xf]
    %v1228 = vld [vmem:[%s8 + $0x60] sm:$0xff]
    %v1229 = vld [vmem:[%s8 + $0x68] sm:$0xf]
    %v1230 = vld [vmem:[%s8 + $0x6c] sm:$0xff]
    %v1231 = vld [vmem:[%s8 + $0x74] sm:$0xf]
    %v1232 = vld [vmem:[%s8 + $0x78] sm:$0xff]
    %v1233 = vld [vmem:[%s8 + $0x80] sm:$0xf]
    %v1234 = vld [vmem:[%s8 + $0x84] sm:$0xff]
    %v1235 = vld [vmem:[%s8 + $0x8c] sm:$0xf]
    %v1236 = vld [vmem:[%s8 + $0x90] sm:$0xff]
    %v1237 = vld [vmem:[%s8 + $0x98] sm:$0xf]
    %v1238 = vld [vmem:[%s8 + $0x9c] sm:$0xff]
    %v1239 = vld [vmem:[%s8 + $0xa4] sm:$0xf]
    %v1240 = vld [vmem:[%s8 + $0xa8] sm:$0xff]
    %v1241 = vld [vmem:[%s8 + $0xb0] sm:$0xf]
    %v1242 = vld [vmem:[%s8 + $0xb4] sm:$0xff]
    %v1243 = vld [vmem:[%s8 + $0xbc] sm:$0xf]
    %v1276 = vunpack.c.l.b16 %v1212
    %v1277 = vunpack.c.h.b16 %v1212
    %v1278 = vunpack.c.l.b16 %v1213
    %v1279 = vunpack.c.l.b16 %v1214
    %v1280 = vunpack.c.h.b16 %v1214
    %v1281 = vunpack.c.l.b16 %v1215
    %v1282 = vunpack.c.l.b16 %v1216
    %v1283 = vunpack.c.h.b16 %v1216
    %v1284 = vunpack.c.l.b16 %v1217
    %v1285 = vunpack.c.l.b16 %v1218
    %v1286 = vunpack.c.h.b16 %v1218
    %v1287 = vunpack.c.l.b16 %v1219
    %v1288 = vunpack.c.l.b16 %v1220
    %v1289 = vunpack.c.h.b16 %v1220
    %v1290 = vunpack.c.l.b16 %v1221
    %v1291 = vunpack.c.l.b16 %v1222
    %v1292 = vunpack.c.h.b16 %v1222
    %v1293 = vunpack.c.l.b16 %v1223
    %v1294 = vunpack.c.l.b16 %v1224
    %v1295 = vunpack.c.h.b16 %v1224
    %v1296 = vunpack.c.l.b16 %v1225
    %v1297 = vunpack.c.l.b16 %v1226
    %v1298 = vunpack.c.h.b16 %v1226
    %v1299 = vunpack.c.l.b16 %v1227
    %v1300 = vunpack.c.l.b16 %v1228
    %v1301 = vunpack.c.h.b16 %v1228
    %v1302 = vunpack.c.l.b16 %v1229
    %v1303 = vunpack.c.l.b16 %v1230
    %v1304 = vunpack.c.h.b16 %v1230
    %v1305 = vunpack.c.l.b16 %v1231
    %v1306 = vunpack.c.l.b16 %v1232
    %v1307 = vunpack.c.h.b16 %v1232
    %v1308 = vunpack.c.l.b16 %v1233
    %v1309 = vunpack.c.l.b16 %v1234
    %v1310 = vunpack.c.h.b16 %v1234
    %v1311 = vunpack.c.l.b16 %v1235
    %v1312 = vunpack.c.l.b16 %v1236
    %v1313 = vunpack.c.h.b16 %v1236
    %v1314 = vunpack.c.l.b16 %v1237
    %v1315 = vunpack.c.l.b16 %v1238
    %v1316 = vunpack.c.h.b16 %v1238
    %v1317 = vunpack.c.l.b16 %v1239
    %v1318 = vunpack.c.l.b16 %v1240
    %v1319 = vunpack.c.h.b16 %v1240
    %v1320 = vunpack.c.l.b16 %v1241
    %v1321 = vunpack.c.l.b16 %v1242
    %v1322 = vunpack.c.h.b16 %v1242
    %v1323 = vunpack.c.l.b16 %v1243
    %v1324 = vpack.c.b16 %v1279, %v1276
    %v1325 = vpack.c.b16 %v1280, %v1277
    %v1326 = vpack.c.b16 %v1281, %v1278
    %v1327 = vpack.c.b16 %v1285, %v1282
    %v1328 = vpack.c.b16 %v1286, %v1283
    %v1329 = vpack.c.b16 %v1287, %v1284
    %v1330 = vpack.c.b16 %v1291, %v1288
    %v1331 = vpack.c.b16 %v1292, %v1289
    %v1332 = vpack.c.b16 %v1293, %v1290
    %v1333 = vpack.c.b16 %v1297, %v1294
    %v1334 = vpack.c.b16 %v1298, %v1295
    %v1335 = vpack.c.b16 %v1299, %v1296
    %v1336 = vpack.c.b16 %v1303, %v1300
    %v1337 = vpack.c.b16 %v1304, %v1301
    %v1338 = vpack.c.b16 %v1305, %v1302
    %v1339 = vpack.c.b16 %v1309, %v1306
    %v1340 = vpack.c.b16 %v1310, %v1307
    %v1341 = vpack.c.b16 %v1311, %v1308
    %v1342 = vpack.c.b16 %v1315, %v1312
    %v1343 = vpack.c.b16 %v1316, %v1313
    %v1344 = vpack.c.b16 %v1317, %v1314
    %v1345 = vpack.c.b16 %v1321, %v1318
    %v1346 = vpack.c.b16 %v1322, %v1319
    %v1347 = vpack.c.b16 %v1323, %v1320
    %1372 = vmatprep.subr.bf16.mxu0 %v1325
    %1373 = vmatpush1.bf16.msra.mxu0 %v1324
    %1374 = vmatprep.subr.bf16.mxu0 %v1328
    %1375 = vmatpush1.bf16.msra.mxu0 %v1327
    %1376 = vmatprep.subr.bf16.mxu0 %v1331
    %1377 = vmatpush1.bf16.msra.mxu0 %v1330
    %1378 = vmatprep.subr.bf16.mxu0 %v1334
    %1379 = vmatpush1.bf16.msra.mxu0 %v1333
    %1380 = vmatprep.subr.bf16.mxu0 %v1337
    %1381 = vmatpush1.bf16.msra.mxu0 %v1336
    %1382 = vmatprep.subr.bf16.mxu0 %v1340
    %1383 = vmatpush1.bf16.msra.mxu0 %v1339
    %1384 = vmatprep.subr.bf16.mxu0 %v1343
    %1385 = vmatpush1.bf16.msra.mxu0 %v1342
    %1386 = vmatprep.subr.bf16.mxu0 %v1346
    %1387 = vmatpush1.bf16.msra.mxu0 %v1345
    %1388 = vmatprep.subr.bf16.mxu0 0
    %1389 = vmatpush1.bf16.msra.mxu0 0
    %1390 = vmatprep.subr.bf16.mxu0 0
    %1391 = vmatpush1.bf16.msra.mxu0 0
    %1392 = vmatprep.subr.bf16.mxu0 0
    %1393 = vmatpush1.bf16.msra.mxu0 0
    %1394 = vmatprep.subr.bf16.mxu0 0
    %1395 = vmatpush1.bf16.msra.mxu0 0
    %1396 = vmatprep.subr.bf16.mxu0 0
    %1397 = vmatpush1.bf16.msra.mxu0 0
    %1398 = vmatprep.subr.bf16.mxu0 0
    %1399 = vmatpush1.bf16.msra.mxu0 0
    %1400 = vmatprep.subr.bf16.mxu0 0
    %1401 = vmatpush1.bf16.msra.mxu0 0
    %1402 = vmatprep.subr.bf16.mxu0 0
    %1403 = vmatpush1.bf16.msra.mxu0 0
    %1404 = vmatprep.mubr.bf16.mxu0 0
    %1405 = vmatmul.mubr.bf16.gmra.mrb[0].mxu0 %v1211
    %v1406 = vpop.f32.mrb[0].mxu0
    %v1407 = vadd.f32 0.0, %v1406
    %v1408 = vpop.f32.mrb[0].mxu0
    %v1409 = vadd.f32 0.0, %v1408
    %v1410 = vpop.f32.mrb[0].mxu0
    %v1411 = vpop.f32.mrb[0].mxu0
    %1412 = vdwg.mxu0
    %1413 = vmatprep.subr.bf16.mxu0 0
    %1414 = vmatpush1.bf16.msra.mxu0 %v1326
    %1415 = vmatprep.subr.bf16.mxu0 0
    %1416 = vmatpush1.bf16.msra.mxu0 %v1329
    %1417 = vmatprep.subr.bf16.mxu0 0
    %1418 = vmatpush1.bf16.msra.mxu0 %v1332
    %1419 = vmatprep.subr.bf16.mxu0 0
    %1420 = vmatpush1.bf16.msra.mxu0 %v1335
    %1421 = vmatprep.subr.bf16.mxu0 0
    %1422 = vmatpush1.bf16.msra.mxu0 %v1338
    %1423 = vmatprep.subr.bf16.mxu0 0
    %1424 = vmatpush1.bf16.msra.mxu0 %v1341
    %1425 = vmatprep.subr.bf16.mxu0 0
    %1426 = vmatpush1.bf16.msra.mxu0 %v1344
    %1427 = vmatprep.subr.bf16.mxu0 0
    %1428 = vmatpush1.bf16.msra.mxu0 %v1347
    %1429 = vmatprep.subr.bf16.mxu0 0
    %1430 = vmatpush1.bf16.msra.mxu0 0
    %1431 = vmatprep.subr.bf16.mxu0 0
    %1432 = vmatpush1.bf16.msra.mxu0 0
    %1433 = vmatprep.subr.bf16.mxu0 0
    %1434 = vmatpush1.bf16.msra.mxu0 0
    %1435 = vmatprep.subr.bf16.mxu0 0
    %1436 = vmatpush1.bf16.msra.mxu0 0
    %1437 = vmatprep.subr.bf16.mxu0 0
    %1438 = vmatpush1.bf16.msra.mxu0 0
    %1439 = vmatprep.subr.bf16.mxu0 0
    %1440 = vmatpush1.bf16.msra.mxu0 0
    %1441 = vmatprep.subr.bf16.mxu0 0
    %1442 = vmatpush1.bf16.msra.mxu0 0
    %1443 = vmatprep.subr.bf16.mxu0 0
    %1444 = vmatpush1.bf16.msra.mxu0 0
    %1445 = vmatprep.mubr.bf16.mxu0 0
    %1446 = vmatmul.mubr.bf16.gmra.mrb[0].mxu0 %v1211
    %v1447 = vpop.f32.mrb[0].mxu0
    %v1448 = vadd.f32 0.0, %v1447
    %v1449 = vpop.f32.mrb[0].mxu0
    %v1450 = vpop.f32.mrb[0].mxu0
    %v1451 = vpop.f32.mrb[0].mxu0
    %1452 = vdwg.mxu0
    %v1453 = vadd.f32 %v1208, %v1407
    %v1454 = vxor.u32 %v1453, 2147483648
    %v1455 = vmul.f32 %v1454, 1.442695
    %v1456 = vpow.pop %v1455
    %v1457 = vadd.f32 %v1456, 1.0
    %v1458 = vrcp.pop %v1457
    %v1459 = vmul.f32 1.0, %v1458
    %v1460 = vadd.f32 %v1209, %v1409
    %v1461 = vxor.u32 %v1460, 2147483648
    %v1462 = vmul.f32 %v1461, 1.442695
    %v1463 = vpow.pop %v1462
    %v1464 = vadd.f32 %v1463, 1.0
    %v1465 = vrcp.pop %v1464
    %v1466 = vmul.f32 1.0, %v1465
    %v1467 = vld [vmem:[%s9] sm:$0x1]
    %v1469 = vlaneseq
    %v1470 = vshrl.u32 %v1469, 7
    %v1471 = vsub.s32 0, %v1470
    %v1472 = vrot.slane %v1467, %v1471
    %v1474 = vadd.f32 %v1448, %v1472
    %v1475 = vmul.f32 %v1459, %v1474
    %v1476 = vadd.f32 %v1210, %v1475
    %v1477 = vtanh.pop %v1476
    %v1478 = vsub.f32 1.0, %v1466
    %v1479 = vmul.f32 %v1478, %v1477
    %v1480 = vmul.f32 %v1466, %v1201
    %v1481 = vadd.f32 %v1479, %v1480
    %s1482 = scalar_lea.vmem [#allocation3], %s1202
    %1483 = vst [vmem:[%s1482] sm:$0xff] %v1481
  $region58: #{forward.1} parent=0 // loop_footer
    %s661 = sadd.s32 1, %s657
  $region59: #{forward.1} parent=0 // loop_footer_branch
    %656 = sbr.rel target = $region55
  $region60: #{forward.1} parent=0 // loop_exit
    _
  %v1484 = vld [vmem:[#allocation3] sm:$0xff]
  %v1485 = vld [vmem:[#allocation3 + $0x8] sm:$0xff]
  %v1486 = vld [vmem:[#allocation3 + $0x10] sm:$0xff]
  %v1487 = vld [vmem:[#allocation3 + $0x18] sm:$0xff]
  %v1488 = vld [vmem:[#allocation3 + $0x20] sm:$0xff]
  %v1489 = vld [vmem:[#allocation3 + $0x28] sm:$0xff]
  %v1490 = vld [vmem:[#allocation3 + $0x30] sm:$0xff]
  %v1491 = vld [vmem:[#allocation3 + $0x38] sm:$0xff]
  %v1492 = vpack.c.bf16 %v1485, %v1484
  %v1493 = vpack.c.bf16 %v1487, %v1486
  %v1494 = vpack.c.bf16 %v1489, %v1488
  %v1495 = vpack.c.bf16 %v1491, %v1490
  %v1496 = vld [vmem:[%s12] sm:$0xf]
  %v1497 = vld [vmem:[%s12 + $0x4] sm:$0xf]
  %v1498 = vld [vmem:[%s12 + $0x8] sm:$0xf]
  %v1499 = vld [vmem:[%s12 + $0xc] sm:$0xf]
  %v1500 = vld [vmem:[%s12 + $0x10] sm:$0xf]
  %v1501 = vld [vmem:[%s12 + $0x14] sm:$0xf]
  %v1502 = vld [vmem:[%s12 + $0x18] sm:$0xf]
  %v1503 = vld [vmem:[%s12 + $0x1c] sm:$0xf]
  %v1504 = vld [vmem:[%s12 + $0x20] sm:$0xf]
  %v1505 = vld [vmem:[%s12 + $0x24] sm:$0xf]
  %v1506 = vld [vmem:[%s12 + $0x28] sm:$0xf]
  %v1507 = vld [vmem:[%s12 + $0x2c] sm:$0xf]
  %v1508 = vld [vmem:[%s12 + $0x30] sm:$0xf]
  %v1509 = vld [vmem:[%s12 + $0x34] sm:$0xf]
  %v1510 = vld [vmem:[%s12 + $0x38] sm:$0xf]
  %v1511 = vld [vmem:[%s12 + $0x3c] sm:$0xf]
  %v1512 = vld [vmem:[%s13] sm:$0x1]
  %v1514 = vlaneseq
  %v1515 = vshrl.u32 %v1514, 7
  %v1516 = vsub.s32 0, %v1515
  %v1517 = vrot.slane %v1512, %v1516
  %v1535 = vunpack.c.l.b16 %v1496
  %v1536 = vunpack.c.l.b16 %v1497
  %v1537 = vunpack.c.l.b16 %v1498
  %v1538 = vunpack.c.l.b16 %v1499
  %v1539 = vunpack.c.l.b16 %v1500
  %v1540 = vunpack.c.l.b16 %v1501
  %v1541 = vunpack.c.l.b16 %v1502
  %v1542 = vunpack.c.l.b16 %v1503
  %v1543 = vunpack.c.l.b16 %v1504
  %v1544 = vunpack.c.l.b16 %v1505
  %v1545 = vunpack.c.l.b16 %v1506
  %v1546 = vunpack.c.l.b16 %v1507
  %v1547 = vunpack.c.l.b16 %v1508
  %v1548 = vunpack.c.l.b16 %v1509
  %v1549 = vunpack.c.l.b16 %v1510
  %v1550 = vunpack.c.l.b16 %v1511
  %v1551 = vpack.c.b16 %v1536, %v1535
  %v1552 = vpack.c.b16 %v1538, %v1537
  %v1553 = vpack.c.b16 %v1540, %v1539
  %v1554 = vpack.c.b16 %v1542, %v1541
  %v1555 = vpack.c.b16 %v1544, %v1543
  %v1556 = vpack.c.b16 %v1546, %v1545
  %v1557 = vpack.c.b16 %v1548, %v1547
  %v1558 = vpack.c.b16 %v1550, %v1549
  %1567 = vmatprep.subr.bf16.mxu0 0
  %1568 = vmatpush1.bf16.msra.mxu0 %v1551
  %1569 = vmatprep.subr.bf16.mxu0 0
  %1570 = vmatpush1.bf16.msra.mxu0 %v1552
  %1571 = vmatprep.subr.bf16.mxu0 0
  %1572 = vmatpush1.bf16.msra.mxu0 %v1553
  %1573 = vmatprep.subr.bf16.mxu0 0
  %1574 = vmatpush1.bf16.msra.mxu0 %v1554
  %1575 = vmatprep.subr.bf16.mxu0 0
  %1576 = vmatpush1.bf16.msra.mxu0 %v1555
  %1577 = vmatprep.subr.bf16.mxu0 0
  %1578 = vmatpush1.bf16.msra.mxu0 %v1556
  %1579 = vmatprep.subr.bf16.mxu0 0
  %1580 = vmatpush1.bf16.msra.mxu0 %v1557
  %1581 = vmatprep.subr.bf16.mxu0 0
  %1582 = vmatpush1.bf16.msra.mxu0 %v1558
  %1583 = vmatprep.subr.bf16.mxu0 0
  %1584 = vmatpush1.bf16.msra.mxu0 0
  %1585 = vmatprep.subr.bf16.mxu0 0
  %1586 = vmatpush1.bf16.msra.mxu0 0
  %1587 = vmatprep.subr.bf16.mxu0 0
  %1588 = vmatpush1.bf16.msra.mxu0 0
  %1589 = vmatprep.subr.bf16.mxu0 0
  %1590 = vmatpush1.bf16.msra.mxu0 0
  %1591 = vmatprep.subr.bf16.mxu0 0
  %1592 = vmatpush1.bf16.msra.mxu0 0
  %1593 = vmatprep.subr.bf16.mxu0 0
  %1594 = vmatpush1.bf16.msra.mxu0 0
  %1595 = vmatprep.subr.bf16.mxu0 0
  %1596 = vmatpush1.bf16.msra.mxu0 0
  %1597 = vmatprep.subr.bf16.mxu0 0
  %1598 = vmatpush1.bf16.msra.mxu0 0
  %1599 = vmatprep.mubr.bf16.mxu0 0
  %1600 = vmatmul.mubr.bf16.gmra.mrb[0].mxu0 %v1492
  %v1601 = vpop.f32.mrb[0].mxu0
  %v1602 = vadd.f32 %v1517, %v1601
  %v1603 = vpop.f32.mrb[0].mxu0
  %v1604 = vpop.f32.mrb[0].mxu0
  %v1605 = vadd.f32 %v1517, %v1604
  %v1606 = vpop.f32.mrb[0].mxu0
  %1607 = vmatprep.mubr.bf16.mxu0 0
  %1608 = vmatmul.mubr.bf16.gmra.mrb[0].mxu0 %v1493
  %v1609 = vpop.f32.mrb[0].mxu0
  %v1610 = vadd.f32 %v1517, %v1609
  %v1611 = vpop.f32.mrb[0].mxu0
  %v1612 = vpop.f32.mrb[0].mxu0
  %v1613 = vadd.f32 %v1517, %v1612
  %v1614 = vpop.f32.mrb[0].mxu0
  %1615 = vmatprep.mubr.bf16.mxu0 0
  %1616 = vmatmul.mubr.bf16.gmra.mrb[0].mxu0 %v1494
  %v1617 = vpop.f32.mrb[0].mxu0
  %v1618 = vadd.f32 %v1517, %v1617
  %v1619 = vpop.f32.mrb[0].mxu0
  %v1620 = vpop.f32.mrb[0].mxu0
  %v1621 = vadd.f32 %v1517, %v1620
  %v1622 = vpop.f32.mrb[0].mxu0
  %1623 = vmatprep.mubr.bf16.mxu0 0
  %1624 = vmatmul.mubr.bf16.gmra.mrb[0].mxu0 %v1495
  %v1625 = vpop.f32.mrb[0].mxu0
  %v1626 = vadd.f32 %v1517, %v1625
  %v1627 = vpop.f32.mrb[0].mxu0
  %v1628 = vpop.f32.mrb[0].mxu0
  %v1629 = vadd.f32 %v1517, %v1628
  %v1630 = vpop.f32.mrb[0].mxu0
  %1631 = vdwg.mxu0
  %v1632 = vxor.u32 %v1602, 2147483648
  %v1633 = vxor.u32 %v1605, 2147483648
  %v1634 = vxor.u32 %v1610, 2147483648
  %v1635 = vxor.u32 %v1613, 2147483648
  %v1636 = vxor.u32 %v1618, 2147483648
  %v1637 = vxor.u32 %v1621, 2147483648
  %v1638 = vxor.u32 %v1626, 2147483648
  %v1639 = vxor.u32 %v1629, 2147483648
  %v1640 = vmul.f32 %v1632, 1.442695
  %v1641 = vpow.pop %v1640
  %v1642 = vmul.f32 %v1633, 1.442695
  %v1643 = vpow.pop %v1642
  %v1644 = vmul.f32 %v1634, 1.442695
  %v1645 = vpow.pop %v1644
  %v1646 = vmul.f32 %v1635, 1.442695
  %v1647 = vpow.pop %v1646
  %v1648 = vmul.f32 %v1636, 1.442695
  %v1649 = vpow.pop %v1648
  %v1650 = vmul.f32 %v1637, 1.442695
  %v1651 = vpow.pop %v1650
  %v1652 = vmul.f32 %v1638, 1.442695
  %v1653 = vpow.pop %v1652
  %v1654 = vmul.f32 %v1639, 1.442695
  %v1655 = vpow.pop %v1654
  %v1656 = vadd.f32 %v1641, 1.0
  %v1657 = vadd.f32 %v1643, 1.0
  %v1658 = vadd.f32 %v1645, 1.0
  %v1659 = vadd.f32 %v1647, 1.0
  %v1660 = vadd.f32 %v1649, 1.0
  %v1661 = vadd.f32 %v1651, 1.0
  %v1662 = vadd.f32 %v1653, 1.0
  %v1663 = vadd.f32 %v1655, 1.0
  %v1664 = vrcp.pop %v1656
  %v1665 = vmul.f32 1.0, %v1664
  %v1666 = vrcp.pop %v1657
  %v1667 = vmul.f32 1.0, %v1666
  %v1668 = vrcp.pop %v1658
  %v1669 = vmul.f32 1.0, %v1668
  %v1670 = vrcp.pop %v1659
  %v1671 = vmul.f32 1.0, %v1670
  %v1672 = vrcp.pop %v1660
  %v1673 = vmul.f32 1.0, %v1672
  %v1674 = vrcp.pop %v1661
  %v1675 = vmul.f32 1.0, %v1674
  %v1676 = vrcp.pop %v1662
  %v1677 = vmul.f32 1.0, %v1676
  %v1678 = vrcp.pop %v1663
  %v1679 = vmul.f32 1.0, %v1678
  %1680 = vst [vmem:[%s14] sm:$0xff] %v1665
  %1681 = vst [vmem:[%s14 + $0x8] sm:$0xff] %v1667
  %1682 = vst [vmem:[%s14 + $0x10] sm:$0xff] %v1669
  %1683 = vst [vmem:[%s14 + $0x18] sm:$0xff] %v1671
  %1684 = vst [vmem:[%s14 + $0x20] sm:$0xff] %v1673
  %1685 = vst [vmem:[%s14 + $0x28] sm:$0xff] %v1675
  %1686 = vst [vmem:[%s14 + $0x30] sm:$0xff] %v1677
  %1687 = vst [vmem:[%s14 + $0x38] sm:$0xff] %v1679
  // Predicated region
  $region76: #{forward.1} parent=0 // pred_check
    _
  $region77: #{forward.1} parent=0 // pred_check_branch
    %1689 = sbr.rel (0) target = $region79
  $region78: #{forward.1} parent=0 // pred_region
    _
  $region79: #{forward.1} parent=0 // pred_fallthru
    _
  // Predicated region
  $region80: #{forward.1} parent=0 // pred_check
    _
  $region81: #{forward.1} parent=0 // pred_check_branch
    %1691 = sbr.rel (0) target = $region83
  $region82: #{forward.1} parent=0 // pred_region
    _
  $region83: #{forward.1} parent=0 // pred_fallthru
    _

</llo_original>
